<compile_context>
chip_gen: v7x
topology: tpu7x:2x2x1
jax: 0.10.0
libtpu: 0.0.40
codegen_flags: <defaults>
</compile_context>

<pallas_src>
import jax
import jax.numpy as jnp
from jax.experimental import pallas as pl
from jax.experimental.pallas import tpu as pltpu


# ----------------------------------------------------------------------------
# Packed-weight slab layout (all offsets are static, sublane-aligned)
# ----------------------------------------------------------------------------
def _slab_offsets(num_layers, hidden_size):
    G = 4 * hidden_size
    r = 0
    layers = []
    for _ in range(num_layers):
        layers.append({"w_ih": r, "w_hh": r + G, "b": r + 2 * G})
        r += 2 * G + 8            # bias block padded to one sublane tile (8 rows)
    fc_w_off, fc_b_off = r, r + G
    r += G + 8
    return layers, fc_w_off, fc_b_off, r


def _reorder_gate_cols(a, H):
    """PyTorch gate order [i, f, g, o] along the last (4H) axis -> packed [o, i, f, g]."""
    i, f, g, o = (a[..., k * H:(k + 1) * H] for k in range(4))
    return jnp.concatenate([o, i, f, g], axis=-1)


def pack_params(params, input_size):
    """One-time host-side packing of all weights/biases into one (rows, 4H) slab.

    Matrices are stored transposed (d_in, 4H) / (H, 4H), gate-column-reordered
    to [o, i, f, g], and zero-row-padded to 4H rows so the full-width (lanes
    [H:4H] garbage) hidden state can be fed to the MXU directly.
    """
    lstm = params["lstm"]
    num_layers = len(lstm)
    H = lstm[0]["w_hh"].shape[1]
    G = 4 * H
    O = params["fc_w"].shape[0]
    layer_offs, fc_w_off, fc_b_off, total_rows = _slab_offsets(num_layers, H)

    slab = jnp.zeros((total_rows, G), jnp.float32)
    for l, layer in enumerate(lstm):
        off = layer_offs[l]
        w_ih_t = _reorder_gate_cols(layer["w_ih"].T, H)               # (d_in, G)
        w_hh_t = _reorder_gate_cols(layer["w_hh"].T, H)               # (H, G)
        bias = _reorder_gate_cols(layer["b_ih"] + layer["b_hh"], H)   # (G,)
        slab = slab.at[off["w_ih"]:off["w_ih"] + w_ih_t.shape[0], :].set(w_ih_t)
        slab = slab.at[off["w_hh"]:off["w_hh"] + H, :].set(w_hh_t)
        slab = slab.at[off["b"], :].set(bias)
    slab = slab.at[fc_w_off:fc_w_off + H, :O].set(params["fc_w"].T)   # (H, O)
    slab = slab.at[fc_b_off, :O].set(params["fc_b"])
    return slab


# ----------------------------------------------------------------------------
# Fused Pallas kernel (both LSTM layers + FC head, grid-less, VMEM-resident)
# ----------------------------------------------------------------------------
def _make_lstm_model_kernel(num_layers, seq_len, Bp, H, layer_offs, fc_w_off, fc_b_off):
    G = 4 * H   # = 128 lanes: one full vreg row per batch element

    def kernel(x_ref, w_ref, out_ref):
        # Lane-group mask: tanh for the 'g' gate (packed group 3), sigmoid otherwise.
        lane = jax.lax.broadcasted_iota(jnp.int32, (Bp, G), 1)
        is_g = lane >= 3 * H

        inp = x_ref[...]                                   # (T*Bp, G), time-major
        h = jnp.zeros((Bp, G), jnp.float32)
        for l in range(num_layers):
            offs = layer_offs[l]
            wih = w_ref[offs["w_ih"]:offs["w_ih"] + G, :]  # (G, G), rows >= d_in are 0
            whh = w_ref[offs["w_hh"]:offs["w_hh"] + G, :]  # (G, G), rows >= H are 0
            bias = w_ref[offs["b"]:offs["b"] + 1, :]       # (1, G)

            # Hoisted input projection: ONE well-shaped MXU matmul per layer.
            gin = jnp.dot(inp, wih, preferred_element_type=jnp.float32) + bias

            h = jnp.zeros((Bp, G), jnp.float32)            # valid lanes: [0:H]
            c = jnp.zeros((Bp, G), jnp.float32)
            hs = []
            for t in range(seq_len):                       # fully unrolled recurrence
                gates = gin[t * Bp:(t + 1) * Bp, :] + jnp.dot(
                    h, whh, preferred_element_type=jnp.float32)        # (Bp, G)
                # Full-vreg activations (2 EUP ops + 1 select), alignment on the XLU.
                act = jnp.where(is_g, jnp.tanh(gates), jax.nn.sigmoid(gates))
                o_g = act                                   # lanes [0:H] = o
                f_g = pltpu.roll(act, shift=2 * H, axis=1)  # lanes [0:H] = f
                # i/g pair sits at the +-1 group distances; their product is
                # commutative, so the assignment is rotation-direction agnostic.
                i_g = pltpu.roll(act, shift=3 * H, axis=1)
                g_g = pltpu.roll(act, shift=1 * H, axis=1)
                c = f_g * c + i_g * g_g                     # lanes [H:] garbage, bounded
                h = o_g * jnp.tanh(c)
                if l < num_layers - 1:
                    hs.append(h)
            if l < num_layers - 1:
                # Next layer's input as a value (no VMEM scratch round-trip).
                inp = jnp.concatenate(hs, axis=0)           # (T*Bp, G)

        fcw = w_ref[fc_w_off:fc_w_off + G, :]               # rows >= H and cols >= O are 0
        fcb = w_ref[fc_b_off:fc_b_off + 1, :]
        # Lane-dense (Bp, 128) store; wrapper slices out (B, O).
        out_ref[...] = (jnp.dot(h, fcw, preferred_element_type=jnp.float32)
                        + fcb).astype(out_ref.dtype)

    return kernel


# ----------------------------------------------------------------------------
# Wrapper
# ----------------------------------------------------------------------------
def make_lstm_forward(input_size, hidden_size, num_layers, output_size):
    H = hidden_size
    G = 4 * H
    layer_offs, fc_w_off, fc_b_off, _ = _slab_offsets(num_layers, H)

    def forward(x, slab):
        """x: (B, T, input_size) batch_first.  slab: packed weights.  -> (B, output_size)."""
        B, T, D = x.shape
        assert D <= G, "input_size must be <= 4*hidden_size for this packing"
        Bp = ((B + 7) // 8) * 8                   # pad batch to the f32 sublane tile

        # Time-major, batch-padded, lane-padded input: every per-step block is an
        # aligned (8, 128) tile inside the kernel.
        x_tm = jnp.transpose(x, (1, 0, 2))                        # (T, B, D)
        x_tm = jnp.pad(x_tm, ((0, 0), (0, Bp - B), (0, G - D))).reshape(T * Bp, G)

        out = pl.pallas_call(
            _make_lstm_model_kernel(num_layers, T, Bp, H,
                                    layer_offs, fc_w_off, fc_b_off),
            out_shape=jax.ShapeDtypeStruct((Bp, G), jnp.float32),
            in_specs=[pl.BlockSpec(memory_space=pltpu.MemorySpace.VMEM),
                      pl.BlockSpec(memory_space=pltpu.MemorySpace.VMEM)],
            out_specs=pl.BlockSpec(memory_space=pltpu.MemorySpace.VMEM),
            compiler_params=pltpu.CompilerParams(vmem_limit_bytes=4 * 1024 * 1024),
        )(x_tm, slab)
        return out[:B, :output_size]

    return forward


# ----------------------------------------------------------------------------
# Deterministic PyTorch-layout parameter init (U(-1/sqrt(H), 1/sqrt(H)))
# ----------------------------------------------------------------------------
def init_params(key, input_size, hidden_size, num_layers, output_size):
    stdv = 1.0 / (hidden_size ** 0.5)
    params = {"lstm": []}
    for layer in range(num_layers):
        d_in = input_size if layer == 0 else hidden_size
        key, k1, k2, k3, k4 = jax.random.split(key, 5)
        params["lstm"].append({
            "w_ih": jax.random.uniform(k1, (4 * hidden_size, d_in), jnp.float32, -stdv, stdv),
            "w_hh": jax.random.uniform(k2, (4 * hidden_size, hidden_size), jnp.float32, -stdv, stdv),
            "b_ih": jax.random.uniform(k3, (4 * hidden_size,), jnp.float32, -stdv, stdv),
            "b_hh": jax.random.uniform(k4, (4 * hidden_size,), jnp.float32, -stdv, stdv),
        })
    key, k5, k6 = jax.random.split(key, 3)
    params["fc_w"] = jax.random.uniform(k5, (output_size, hidden_size), jnp.float32, -stdv, stdv)
    params["fc_b"] = jax.random.uniform(k6, (output_size,), jnp.float32, -stdv, stdv)
    return params


# ----------------------------------------------------------------------------
# Pure-JAX reference (PyTorch nn.LSTM semantics) for correctness check
# ----------------------------------------------------------------------------
def lstm_model_ref(x, params):
    B, T, _ = x.shape
    h_seq = x
    for layer in params["lstm"]:
        H = layer["w_hh"].shape[1]
        w_ih_t, w_hh_t = layer["w_ih"].T, layer["w_hh"].T
        b = layer["b_ih"] + layer["b_hh"]
        h = jnp.zeros((B, H), jnp.float32)
        c = jnp.zeros((B, H), jnp.float32)
        outs = []
        for t in range(T):
            gates = h_seq[:, t, :] @ w_ih_t + h @ w_hh_t + b
            i = jax.nn.sigmoid(gates[:, :H])
            f = jax.nn.sigmoid(gates[:, H:2 * H])
            g = jnp.tanh(gates[:, 2 * H:3 * H])
            o = jax.nn.sigmoid(gates[:, 3 * H:])
            c = f * c + i * g
            h = o * jnp.tanh(c)
            outs.append(h)
        h_seq = jnp.stack(outs, axis=1)
    return h_seq[:, -1, :] @ params["fc_w"].T + params["fc_b"]


if __name__ == "__main__":
    INPUT_SIZE, HIDDEN_SIZE, NUM_LAYERS, OUTPUT_SIZE = 8, 32, 2, 4
    BATCH, SEQ = 2, 8

    key = jax.random.PRNGKey(0)
    pkey, xkey = jax.random.split(key)
    params = init_params(pkey, INPUT_SIZE, HIDDEN_SIZE, NUM_LAYERS, OUTPUT_SIZE)
    x = jax.random.normal(xkey, (BATCH, SEQ, INPUT_SIZE), dtype=jnp.float32)

    slab = pack_params(params, INPUT_SIZE)             # one-time weight packing
    fwd = jax.jit(make_lstm_forward(INPUT_SIZE, HIDDEN_SIZE, NUM_LAYERS, OUTPUT_SIZE))
    out = jax.block_until_ready(fwd(x, slab))

    ref = lstm_model_ref(x, params)
    assert out.shape == (BATCH, OUTPUT_SIZE), out.shape
    assert bool(jnp.allclose(out, ref, rtol=1e-4, atol=1e-4)), "mismatch vs reference"

    print("KERNEL_OK")
</pallas_src>

<mosaic_0001>
module attributes {stable_mosaic.version = 11 : i64} {
  func.func @kernel(%arg0: memref<64x128xf32, #tpu.memory_space<vmem>>, %arg1: memref<664x128xf32, #tpu.memory_space<vmem>>, %arg2: memref<8x128xf32, #tpu.memory_space<vmem>>) attributes {dimension_semantics = [], scalar_prefetch = 0 : i64, scratch_operands = 0 : i64, tpu.core_type = #tpu.core_type<tc>} {
    %0 = tpu.iota {dimensions = array<i32: 1>} : vector<8x128xi32>
    %c96_i32 = arith.constant 96 : i32
    %1 = vector.broadcast %c96_i32 : i32 to vector<8x128xi32>
    %2 = arith.cmpi sge, %0, %1 : vector<8x128xi32>
    %c0 = arith.constant 0 : index
    %c0_0 = arith.constant 0 : index
    %3 = vector.load %arg0[%c0, %c0_0] : memref<64x128xf32, #tpu.memory_space<vmem>>, vector<64x128xf32>
    %c0_1 = arith.constant 0 : index
    %c0_2 = arith.constant 0 : index
    %4 = vector.load %arg1[%c0_1, %c0_2] : memref<664x128xf32, #tpu.memory_space<vmem>>, vector<128x128xf32>
    %c128 = arith.constant 128 : index
    %c0_3 = arith.constant 0 : index
    %5 = vector.load %arg1[%c128, %c0_3] : memref<664x128xf32, #tpu.memory_space<vmem>>, vector<128x128xf32>
    %c256 = arith.constant 256 : index
    %c0_4 = arith.constant 0 : index
    %6 = vector.load %arg1[%c256, %c0_4] : memref<664x128xf32, #tpu.memory_space<vmem>>, vector<1x128xf32>
    %cst = arith.constant dense<0.000000e+00> : vector<64x128xf32>
    %7 = tpu.matmul %3, %4, %cst {dimension_numbers = #tpu.dot_dimension_numbers<[1], [0], [0], [1], [0, 0, 1, 1], [], []>} : vector<64x128xf32>, vector<128x128xf32>, vector<64x128xf32> -> vector<64x128xf32>
    %8 = vector.broadcast %6 : vector<1x128xf32> to vector<64x128xf32>
    %9 = arith.addf %7, %8 : vector<64x128xf32>
    %cst_5 = arith.constant 0.000000e+00 : f32
    %10 = vector.broadcast %cst_5 : f32 to vector<8x128xf32>
    %cst_6 = arith.constant 0.000000e+00 : f32
    %11 = vector.broadcast %cst_6 : f32 to vector<8x128xf32>
    %12 = vector.extract_strided_slice %9 {offsets = [0, 0], sizes = [8, 128], strides = [1, 1]} : vector<64x128xf32> to vector<8x128xf32>
    %cst_7 = arith.constant dense<0.000000e+00> : vector<8x128xf32>
    %13 = tpu.matmul %10, %5, %cst_7 {dimension_numbers = #tpu.dot_dimension_numbers<[1], [0], [0], [1], [0, 0, 1, 1], [], []>} : vector<8x128xf32>, vector<128x128xf32>, vector<8x128xf32> -> vector<8x128xf32>
    %14 = arith.addf %12, %13 : vector<8x128xf32>
    %15 = math.tanh %14 : vector<8x128xf32>
    %16 = arith.negf %14 : vector<8x128xf32>
    %17 = math.exp %16 : vector<8x128xf32>
    %cst_8 = arith.constant 1.000000e+00 : f32
    %18 = vector.broadcast %cst_8 : f32 to vector<8x128xf32>
    %19 = arith.addf %18, %17 : vector<8x128xf32>
    %20 = arith.divf %18, %19 : vector<8x128xf32>
    %21 = arith.select %2, %15, %20 : vector<8x128xi1>, vector<8x128xf32>
    %c64_i32 = arith.constant 64 : i32
    %22 = tpu.dynamic_rotate %21 by %c64_i32 dim 1 : vector<8x128xf32>, i32 -> vector<8x128xf32>
    %c96_i32_9 = arith.constant 96 : i32
    %23 = tpu.dynamic_rotate %21 by %c96_i32_9 dim 1 : vector<8x128xf32>, i32 -> vector<8x128xf32>
    %c32_i32 = arith.constant 32 : i32
    %24 = tpu.dynamic_rotate %21 by %c32_i32 dim 1 : vector<8x128xf32>, i32 -> vector<8x128xf32>
    %25 = arith.mulf %22, %11 : vector<8x128xf32>
    %26 = arith.mulf %23, %24 : vector<8x128xf32>
    %27 = arith.addf %25, %26 : vector<8x128xf32>
    %28 = math.tanh %27 : vector<8x128xf32>
    %29 = arith.mulf %21, %28 : vector<8x128xf32>
    %30 = vector.extract_strided_slice %9 {offsets = [8, 0], sizes = [8, 128], strides = [1, 1]} : vector<64x128xf32> to vector<8x128xf32>
    %cst_10 = arith.constant dense<0.000000e+00> : vector<8x128xf32>
    %31 = tpu.matmul %29, %5, %cst_10 {dimension_numbers = #tpu.dot_dimension_numbers<[1], [0], [0], [1], [0, 0, 1, 1], [], []>} : vector<8x128xf32>, vector<128x128xf32>, vector<8x128xf32> -> vector<8x128xf32>
    %32 = arith.addf %30, %31 : vector<8x128xf32>
    %33 = math.tanh %32 : vector<8x128xf32>
    %34 = arith.negf %32 : vector<8x128xf32>
    %35 = math.exp %34 : vector<8x128xf32>
    %cst_11 = arith.constant 1.000000e+00 : f32
    %36 = vector.broadcast %cst_11 : f32 to vector<8x128xf32>
    %37 = arith.addf %36, %35 : vector<8x128xf32>
    %38 = arith.divf %36, %37 : vector<8x128xf32>
    %39 = arith.select %2, %33, %38 : vector<8x128xi1>, vector<8x128xf32>
    %c64_i32_12 = arith.constant 64 : i32
    %40 = tpu.dynamic_rotate %39 by %c64_i32_12 dim 1 : vector<8x128xf32>, i32 -> vector<8x128xf32>
    %c96_i32_13 = arith.constant 96 : i32
    %41 = tpu.dynamic_rotate %39 by %c96_i32_13 dim 1 : vector<8x128xf32>, i32 -> vector<8x128xf32>
    %c32_i32_14 = arith.constant 32 : i32
    %42 = tpu.dynamic_rotate %39 by %c32_i32_14 dim 1 : vector<8x128xf32>, i32 -> vector<8x128xf32>
    %43 = arith.mulf %40, %27 : vector<8x128xf32>
    %44 = arith.mulf %41, %42 : vector<8x128xf32>
    %45 = arith.addf %43, %44 : vector<8x128xf32>
    %46 = math.tanh %45 : vector<8x128xf32>
    %47 = arith.mulf %39, %46 : vector<8x128xf32>
    %48 = vector.extract_strided_slice %9 {offsets = [16, 0], sizes = [8, 128], strides = [1, 1]} : vector<64x128xf32> to vector<8x128xf32>
    %cst_15 = arith.constant dense<0.000000e+00> : vector<8x128xf32>
    %49 = tpu.matmul %47, %5, %cst_15 {dimension_numbers = #tpu.dot_dimension_numbers<[1], [0], [0], [1], [0, 0, 1, 1], [], []>} : vector<8x128xf32>, vector<128x128xf32>, vector<8x128xf32> -> vector<8x128xf32>
    %50 = arith.addf %48, %49 : vector<8x128xf32>
    %51 = math.tanh %50 : vector<8x128xf32>
    %52 = arith.negf %50 : vector<8x128xf32>
    %53 = math.exp %52 : vector<8x128xf32>
    %cst_16 = arith.constant 1.000000e+00 : f32
    %54 = vector.broadcast %cst_16 : f32 to vector<8x128xf32>
    %55 = arith.addf %54, %53 : vector<8x128xf32>
    %56 = arith.divf %54, %55 : vector<8x128xf32>
    %57 = arith.select %2, %51, %56 : vector<8x128xi1>, vector<8x128xf32>
    %c64_i32_17 = arith.constant 64 : i32
    %58 = tpu.dynamic_rotate %57 by %c64_i32_17 dim 1 : vector<8x128xf32>, i32 -> vector<8x128xf32>
    %c96_i32_18 = arith.constant 96 : i32
    %59 = tpu.dynamic_rotate %57 by %c96_i32_18 dim 1 : vector<8x128xf32>, i32 -> vector<8x128xf32>
    %c32_i32_19 = arith.constant 32 : i32
    %60 = tpu.dynamic_rotate %57 by %c32_i32_19 dim 1 : vector<8x128xf32>, i32 -> vector<8x128xf32>
    %61 = arith.mulf %58, %45 : vector<8x128xf32>
    %62 = arith.mulf %59, %60 : vector<8x128xf32>
    %63 = arith.addf %61, %62 : vector<8x128xf32>
    %64 = math.tanh %63 : vector<8x128xf32>
    %65 = arith.mulf %57, %64 : vector<8x128xf32>
    %66 = vector.extract_strided_slice %9 {offsets = [24, 0], sizes = [8, 128], strides = [1, 1]} : vector<64x128xf32> to vector<8x128xf32>
    %cst_20 = arith.constant dense<0.000000e+00> : vector<8x128xf32>
    %67 = tpu.matmul %65, %5, %cst_20 {dimension_numbers = #tpu.dot_dimension_numbers<[1], [0], [0], [1], [0, 0, 1, 1], [], []>} : vector<8x128xf32>, vector<128x128xf32>, vector<8x128xf32> -> vector<8x128xf32>
    %68 = arith.addf %66, %67 : vector<8x128xf32>
    %69 = math.tanh %68 : vector<8x128xf32>
    %70 = arith.negf %68 : vector<8x128xf32>
    %71 = math.exp %70 : vector<8x128xf32>
    %cst_21 = arith.constant 1.000000e+00 : f32
    %72 = vector.broadcast %cst_21 : f32 to vector<8x128xf32>
    %73 = arith.addf %72, %71 : vector<8x128xf32>
    %74 = arith.divf %72, %73 : vector<8x128xf32>
    %75 = arith.select %2, %69, %74 : vector<8x128xi1>, vector<8x128xf32>
    %c64_i32_22 = arith.constant 64 : i32
    %76 = tpu.dynamic_rotate %75 by %c64_i32_22 dim 1 : vector<8x128xf32>, i32 -> vector<8x128xf32>
    %c96_i32_23 = arith.constant 96 : i32
    %77 = tpu.dynamic_rotate %75 by %c96_i32_23 dim 1 : vector<8x128xf32>, i32 -> vector<8x128xf32>
    %c32_i32_24 = arith.constant 32 : i32
    %78 = tpu.dynamic_rotate %75 by %c32_i32_24 dim 1 : vector<8x128xf32>, i32 -> vector<8x128xf32>
    %79 = arith.mulf %76, %63 : vector<8x128xf32>
    %80 = arith.mulf %77, %78 : vector<8x128xf32>
    %81 = arith.addf %79, %80 : vector<8x128xf32>
    %82 = math.tanh %81 : vector<8x128xf32>
    %83 = arith.mulf %75, %82 : vector<8x128xf32>
    %84 = vector.extract_strided_slice %9 {offsets = [32, 0], sizes = [8, 128], strides = [1, 1]} : vector<64x128xf32> to vector<8x128xf32>
    %cst_25 = arith.constant dense<0.000000e+00> : vector<8x128xf32>
    %85 = tpu.matmul %83, %5, %cst_25 {dimension_numbers = #tpu.dot_dimension_numbers<[1], [0], [0], [1], [0, 0, 1, 1], [], []>} : vector<8x128xf32>, vector<128x128xf32>, vector<8x128xf32> -> vector<8x128xf32>
    %86 = arith.addf %84, %85 : vector<8x128xf32>
    %87 = math.tanh %86 : vector<8x128xf32>
    %88 = arith.negf %86 : vector<8x128xf32>
    %89 = math.exp %88 : vector<8x128xf32>
    %cst_26 = arith.constant 1.000000e+00 : f32
    %90 = vector.broadcast %cst_26 : f32 to vector<8x128xf32>
    %91 = arith.addf %90, %89 : vector<8x128xf32>
    %92 = arith.divf %90, %91 : vector<8x128xf32>
    %93 = arith.select %2, %87, %92 : vector<8x128xi1>, vector<8x128xf32>
    %c64_i32_27 = arith.constant 64 : i32
    %94 = tpu.dynamic_rotate %93 by %c64_i32_27 dim 1 : vector<8x128xf32>, i32 -> vector<8x128xf32>
    %c96_i32_28 = arith.constant 96 : i32
    %95 = tpu.dynamic_rotate %93 by %c96_i32_28 dim 1 : vector<8x128xf32>, i32 -> vector<8x128xf32>
    %c32_i32_29 = arith.constant 32 : i32
    %96 = tpu.dynamic_rotate %93 by %c32_i32_29 dim 1 : vector<8x128xf32>, i32 -> vector<8x128xf32>
    %97 = arith.mulf %94, %81 : vector<8x128xf32>
    %98 = arith.mulf %95, %96 : vector<8x128xf32>
    %99 = arith.addf %97, %98 : vector<8x128xf32>
    %100 = math.tanh %99 : vector<8x128xf32>
    %101 = arith.mulf %93, %100 : vector<8x128xf32>
    %102 = vector.extract_strided_slice %9 {offsets = [40, 0], sizes = [8, 128], strides = [1, 1]} : vector<64x128xf32> to vector<8x128xf32>
    %cst_30 = arith.constant dense<0.000000e+00> : vector<8x128xf32>
    %103 = tpu.matmul %101, %5, %cst_30 {dimension_numbers = #tpu.dot_dimension_numbers<[1], [0], [0], [1], [0, 0, 1, 1], [], []>} : vector<8x128xf32>, vector<128x128xf32>, vector<8x128xf32> -> vector<8x128xf32>
    %104 = arith.addf %102, %103 : vector<8x128xf32>
    %105 = math.tanh %104 : vector<8x128xf32>
    %106 = arith.negf %104 : vector<8x128xf32>
    %107 = math.exp %106 : vector<8x128xf32>
    %cst_31 = arith.constant 1.000000e+00 : f32
    %108 = vector.broadcast %cst_31 : f32 to vector<8x128xf32>
    %109 = arith.addf %108, %107 : vector<8x128xf32>
    %110 = arith.divf %108, %109 : vector<8x128xf32>
    %111 = arith.select %2, %105, %110 : vector<8x128xi1>, vector<8x128xf32>
    %c64_i32_32 = arith.constant 64 : i32
    %112 = tpu.dynamic_rotate %111 by %c64_i32_32 dim 1 : vector<8x128xf32>, i32 -> vector<8x128xf32>
    %c96_i32_33 = arith.constant 96 : i32
    %113 = tpu.dynamic_rotate %111 by %c96_i32_33 dim 1 : vector<8x128xf32>, i32 -> vector<8x128xf32>
    %c32_i32_34 = arith.constant 32 : i32
    %114 = tpu.dynamic_rotate %111 by %c32_i32_34 dim 1 : vector<8x128xf32>, i32 -> vector<8x128xf32>
    %115 = arith.mulf %112, %99 : vector<8x128xf32>
    %116 = arith.mulf %113, %114 : vector<8x128xf32>
    %117 = arith.addf %115, %116 : vector<8x128xf32>
    %118 = math.tanh %117 : vector<8x128xf32>
    %119 = arith.mulf %111, %118 : vector<8x128xf32>
    %120 = vector.extract_strided_slice %9 {offsets = [48, 0], sizes = [8, 128], strides = [1, 1]} : vector<64x128xf32> to vector<8x128xf32>
    %cst_35 = arith.constant dense<0.000000e+00> : vector<8x128xf32>
    %121 = tpu.matmul %119, %5, %cst_35 {dimension_numbers = #tpu.dot_dimension_numbers<[1], [0], [0], [1], [0, 0, 1, 1], [], []>} : vector<8x128xf32>, vector<128x128xf32>, vector<8x128xf32> -> vector<8x128xf32>
    %122 = arith.addf %120, %121 : vector<8x128xf32>
    %123 = math.tanh %122 : vector<8x128xf32>
    %124 = arith.negf %122 : vector<8x128xf32>
    %125 = math.exp %124 : vector<8x128xf32>
    %cst_36 = arith.constant 1.000000e+00 : f32
    %126 = vector.broadcast %cst_36 : f32 to vector<8x128xf32>
    %127 = arith.addf %126, %125 : vector<8x128xf32>
    %128 = arith.divf %126, %127 : vector<8x128xf32>
    %129 = arith.select %2, %123, %128 : vector<8x128xi1>, vector<8x128xf32>
    %c64_i32_37 = arith.constant 64 : i32
    %130 = tpu.dynamic_rotate %129 by %c64_i32_37 dim 1 : vector<8x128xf32>, i32 -> vector<8x128xf32>
    %c96_i32_38 = arith.constant 96 : i32
    %131 = tpu.dynamic_rotate %129 by %c96_i32_38 dim 1 : vector<8x128xf32>, i32 -> vector<8x128xf32>
    %c32_i32_39 = arith.constant 32 : i32
    %132 = tpu.dynamic_rotate %129 by %c32_i32_39 dim 1 : vector<8x128xf32>, i32 -> vector<8x128xf32>
    %133 = arith.mulf %130, %117 : vector<8x128xf32>
    %134 = arith.mulf %131, %132 : vector<8x128xf32>
    %135 = arith.addf %133, %134 : vector<8x128xf32>
    %136 = math.tanh %135 : vector<8x128xf32>
    %137 = arith.mulf %129, %136 : vector<8x128xf32>
    %138 = vector.extract_strided_slice %9 {offsets = [56, 0], sizes = [8, 128], strides = [1, 1]} : vector<64x128xf32> to vector<8x128xf32>
    %cst_40 = arith.constant dense<0.000000e+00> : vector<8x128xf32>
    %139 = tpu.matmul %137, %5, %cst_40 {dimension_numbers = #tpu.dot_dimension_numbers<[1], [0], [0], [1], [0, 0, 1, 1], [], []>} : vector<8x128xf32>, vector<128x128xf32>, vector<8x128xf32> -> vector<8x128xf32>
    %140 = arith.addf %138, %139 : vector<8x128xf32>
    %141 = math.tanh %140 : vector<8x128xf32>
    %142 = arith.negf %140 : vector<8x128xf32>
    %143 = math.exp %142 : vector<8x128xf32>
    %cst_41 = arith.constant 1.000000e+00 : f32
    %144 = vector.broadcast %cst_41 : f32 to vector<8x128xf32>
    %145 = arith.addf %144, %143 : vector<8x128xf32>
    %146 = arith.divf %144, %145 : vector<8x128xf32>
    %147 = arith.select %2, %141, %146 : vector<8x128xi1>, vector<8x128xf32>
    %c64_i32_42 = arith.constant 64 : i32
    %148 = tpu.dynamic_rotate %147 by %c64_i32_42 dim 1 : vector<8x128xf32>, i32 -> vector<8x128xf32>
    %c96_i32_43 = arith.constant 96 : i32
    %149 = tpu.dynamic_rotate %147 by %c96_i32_43 dim 1 : vector<8x128xf32>, i32 -> vector<8x128xf32>
    %c32_i32_44 = arith.constant 32 : i32
    %150 = tpu.dynamic_rotate %147 by %c32_i32_44 dim 1 : vector<8x128xf32>, i32 -> vector<8x128xf32>
    %151 = arith.mulf %148, %135 : vector<8x128xf32>
    %152 = arith.mulf %149, %150 : vector<8x128xf32>
    %153 = arith.addf %151, %152 : vector<8x128xf32>
    %154 = math.tanh %153 : vector<8x128xf32>
    %155 = arith.mulf %147, %154 : vector<8x128xf32>
    %156 = tpu.concatenate %29, %47, %65, %83, %101, %119, %137, %155 in 0 : vector<8x128xf32>, vector<8x128xf32>, vector<8x128xf32>, vector<8x128xf32>, vector<8x128xf32>, vector<8x128xf32>, vector<8x128xf32>, vector<8x128xf32> -> vector<64x128xf32>
    %c264 = arith.constant 264 : index
    %c0_45 = arith.constant 0 : index
    %157 = vector.load %arg1[%c264, %c0_45] : memref<664x128xf32, #tpu.memory_space<vmem>>, vector<128x128xf32>
    %c392 = arith.constant 392 : index
    %c0_46 = arith.constant 0 : index
    %158 = vector.load %arg1[%c392, %c0_46] : memref<664x128xf32, #tpu.memory_space<vmem>>, vector<128x128xf32>
    %c520 = arith.constant 520 : index
    %c0_47 = arith.constant 0 : index
    %159 = vector.load %arg1[%c520, %c0_47] : memref<664x128xf32, #tpu.memory_space<vmem>>, vector<1x128xf32>
    %cst_48 = arith.constant dense<0.000000e+00> : vector<64x128xf32>
    %160 = tpu.matmul %156, %157, %cst_48 {dimension_numbers = #tpu.dot_dimension_numbers<[1], [0], [0], [1], [0, 0, 1, 1], [], []>} : vector<64x128xf32>, vector<128x128xf32>, vector<64x128xf32> -> vector<64x128xf32>
    %161 = vector.broadcast %159 : vector<1x128xf32> to vector<64x128xf32>
    %162 = arith.addf %160, %161 : vector<64x128xf32>
    %cst_49 = arith.constant 0.000000e+00 : f32
    %163 = vector.broadcast %cst_49 : f32 to vector<8x128xf32>
    %cst_50 = arith.constant 0.000000e+00 : f32
    %164 = vector.broadcast %cst_50 : f32 to vector<8x128xf32>
    %165 = vector.extract_strided_slice %162 {offsets = [0, 0], sizes = [8, 128], strides = [1, 1]} : vector<64x128xf32> to vector<8x128xf32>
    %cst_51 = arith.constant dense<0.000000e+00> : vector<8x128xf32>
    %166 = tpu.matmul %163, %158, %cst_51 {dimension_numbers = #tpu.dot_dimension_numbers<[1], [0], [0], [1], [0, 0, 1, 1], [], []>} : vector<8x128xf32>, vector<128x128xf32>, vector<8x128xf32> -> vector<8x128xf32>
    %167 = arith.addf %165, %166 : vector<8x128xf32>
    %168 = math.tanh %167 : vector<8x128xf32>
    %169 = arith.negf %167 : vector<8x128xf32>
    %170 = math.exp %169 : vector<8x128xf32>
    %cst_52 = arith.constant 1.000000e+00 : f32
    %171 = vector.broadcast %cst_52 : f32 to vector<8x128xf32>
    %172 = arith.addf %171, %170 : vector<8x128xf32>
    %173 = arith.divf %171, %172 : vector<8x128xf32>
    %174 = arith.select %2, %168, %173 : vector<8x128xi1>, vector<8x128xf32>
    %c64_i32_53 = arith.constant 64 : i32
    %175 = tpu.dynamic_rotate %174 by %c64_i32_53 dim 1 : vector<8x128xf32>, i32 -> vector<8x128xf32>
    %c96_i32_54 = arith.constant 96 : i32
    %176 = tpu.dynamic_rotate %174 by %c96_i32_54 dim 1 : vector<8x128xf32>, i32 -> vector<8x128xf32>
    %c32_i32_55 = arith.constant 32 : i32
    %177 = tpu.dynamic_rotate %174 by %c32_i32_55 dim 1 : vector<8x128xf32>, i32 -> vector<8x128xf32>
    %178 = arith.mulf %175, %164 : vector<8x128xf32>
    %179 = arith.mulf %176, %177 : vector<8x128xf32>
    %180 = arith.addf %178, %179 : vector<8x128xf32>
    %181 = math.tanh %180 : vector<8x128xf32>
    %182 = arith.mulf %174, %181 : vector<8x128xf32>
    %183 = vector.extract_strided_slice %162 {offsets = [8, 0], sizes = [8, 128], strides = [1, 1]} : vector<64x128xf32> to vector<8x128xf32>
    %cst_56 = arith.constant dense<0.000000e+00> : vector<8x128xf32>
    %184 = tpu.matmul %182, %158, %cst_56 {dimension_numbers = #tpu.dot_dimension_numbers<[1], [0], [0], [1], [0, 0, 1, 1], [], []>} : vector<8x128xf32>, vector<128x128xf32>, vector<8x128xf32> -> vector<8x128xf32>
    %185 = arith.addf %183, %184 : vector<8x128xf32>
    %186 = math.tanh %185 : vector<8x128xf32>
    %187 = arith.negf %185 : vector<8x128xf32>
    %188 = math.exp %187 : vector<8x128xf32>
    %cst_57 = arith.constant 1.000000e+00 : f32
    %189 = vector.broadcast %cst_57 : f32 to vector<8x128xf32>
    %190 = arith.addf %189, %188 : vector<8x128xf32>
    %191 = arith.divf %189, %190 : vector<8x128xf32>
    %192 = arith.select %2, %186, %191 : vector<8x128xi1>, vector<8x128xf32>
    %c64_i32_58 = arith.constant 64 : i32
    %193 = tpu.dynamic_rotate %192 by %c64_i32_58 dim 1 : vector<8x128xf32>, i32 -> vector<8x128xf32>
    %c96_i32_59 = arith.constant 96 : i32
    %194 = tpu.dynamic_rotate %192 by %c96_i32_59 dim 1 : vector<8x128xf32>, i32 -> vector<8x128xf32>
    %c32_i32_60 = arith.constant 32 : i32
    %195 = tpu.dynamic_rotate %192 by %c32_i32_60 dim 1 : vector<8x128xf32>, i32 -> vector<8x128xf32>
    %196 = arith.mulf %193, %180 : vector<8x128xf32>
    %197 = arith.mulf %194, %195 : vector<8x128xf32>
    %198 = arith.addf %196, %197 : vector<8x128xf32>
    %199 = math.tanh %198 : vector<8x128xf32>
    %200 = arith.mulf %192, %199 : vector<8x128xf32>
    %201 = vector.extract_strided_slice %162 {offsets = [16, 0], sizes = [8, 128], strides = [1, 1]} : vector<64x128xf32> to vector<8x128xf32>
    %cst_61 = arith.constant dense<0.000000e+00> : vector<8x128xf32>
    %202 = tpu.matmul %200, %158, %cst_61 {dimension_numbers = #tpu.dot_dimension_numbers<[1], [0], [0], [1], [0, 0, 1, 1], [], []>} : vector<8x128xf32>, vector<128x128xf32>, vector<8x128xf32> -> vector<8x128xf32>
    %203 = arith.addf %201, %202 : vector<8x128xf32>
    %204 = math.tanh %203 : vector<8x128xf32>
    %205 = arith.negf %203 : vector<8x128xf32>
    %206 = math.exp %205 : vector<8x128xf32>
    %cst_62 = arith.constant 1.000000e+00 : f32
    %207 = vector.broadcast %cst_62 : f32 to vector<8x128xf32>
    %208 = arith.addf %207, %206 : vector<8x128xf32>
    %209 = arith.divf %207, %208 : vector<8x128xf32>
    %210 = arith.select %2, %204, %209 : vector<8x128xi1>, vector<8x128xf32>
    %c64_i32_63 = arith.constant 64 : i32
    %211 = tpu.dynamic_rotate %210 by %c64_i32_63 dim 1 : vector<8x128xf32>, i32 -> vector<8x128xf32>
    %c96_i32_64 = arith.constant 96 : i32
    %212 = tpu.dynamic_rotate %210 by %c96_i32_64 dim 1 : vector<8x128xf32>, i32 -> vector<8x128xf32>
    %c32_i32_65 = arith.constant 32 : i32
    %213 = tpu.dynamic_rotate %210 by %c32_i32_65 dim 1 : vector<8x128xf32>, i32 -> vector<8x128xf32>
    %214 = arith.mulf %211, %198 : vector<8x128xf32>
    %215 = arith.mulf %212, %213 : vector<8x128xf32>
    %216 = arith.addf %214, %215 : vector<8x128xf32>
    %217 = math.tanh %216 : vector<8x128xf32>
    %218 = arith.mulf %210, %217 : vector<8x128xf32>
    %219 = vector.extract_strided_slice %162 {offsets = [24, 0], sizes = [8, 128], strides = [1, 1]} : vector<64x128xf32> to vector<8x128xf32>
    %cst_66 = arith.constant dense<0.000000e+00> : vector<8x128xf32>
    %220 = tpu.matmul %218, %158, %cst_66 {dimension_numbers = #tpu.dot_dimension_numbers<[1], [0], [0], [1], [0, 0, 1, 1], [], []>} : vector<8x128xf32>, vector<128x128xf32>, vector<8x128xf32> -> vector<8x128xf32>
    %221 = arith.addf %219, %220 : vector<8x128xf32>
    %222 = math.tanh %221 : vector<8x128xf32>
    %223 = arith.negf %221 : vector<8x128xf32>
    %224 = math.exp %223 : vector<8x128xf32>
    %cst_67 = arith.constant 1.000000e+00 : f32
    %225 = vector.broadcast %cst_67 : f32 to vector<8x128xf32>
    %226 = arith.addf %225, %224 : vector<8x128xf32>
    %227 = arith.divf %225, %226 : vector<8x128xf32>
    %228 = arith.select %2, %222, %227 : vector<8x128xi1>, vector<8x128xf32>
    %c64_i32_68 = arith.constant 64 : i32
    %229 = tpu.dynamic_rotate %228 by %c64_i32_68 dim 1 : vector<8x128xf32>, i32 -> vector<8x128xf32>
    %c96_i32_69 = arith.constant 96 : i32
    %230 = tpu.dynamic_rotate %228 by %c96_i32_69 dim 1 : vector<8x128xf32>, i32 -> vector<8x128xf32>
    %c32_i32_70 = arith.constant 32 : i32
    %231 = tpu.dynamic_rotate %228 by %c32_i32_70 dim 1 : vector<8x128xf32>, i32 -> vector<8x128xf32>
    %232 = arith.mulf %229, %216 : vector<8x128xf32>
    %233 = arith.mulf %230, %231 : vector<8x128xf32>
    %234 = arith.addf %232, %233 : vector<8x128xf32>
    %235 = math.tanh %234 : vector<8x128xf32>
    %236 = arith.mulf %228, %235 : vector<8x128xf32>
    %237 = vector.extract_strided_slice %162 {offsets = [32, 0], sizes = [8, 128], strides = [1, 1]} : vector<64x128xf32> to vector<8x128xf32>
    %cst_71 = arith.constant dense<0.000000e+00> : vector<8x128xf32>
    %238 = tpu.matmul %236, %158, %cst_71 {dimension_numbers = #tpu.dot_dimension_numbers<[1], [0], [0], [1], [0, 0, 1, 1], [], []>} : vector<8x128xf32>, vector<128x128xf32>, vector<8x128xf32> -> vector<8x128xf32>
    %239 = arith.addf %237, %238 : vector<8x128xf32>
    %240 = math.tanh %239 : vector<8x128xf32>
    %241 = arith.negf %239 : vector<8x128xf32>
    %242 = math.exp %241 : vector<8x128xf32>
    %cst_72 = arith.constant 1.000000e+00 : f32
    %243 = vector.broadcast %cst_72 : f32 to vector<8x128xf32>
    %244 = arith.addf %243, %242 : vector<8x128xf32>
    %245 = arith.divf %243, %244 : vector<8x128xf32>
    %246 = arith.select %2, %240, %245 : vector<8x128xi1>, vector<8x128xf32>
    %c64_i32_73 = arith.constant 64 : i32
    %247 = tpu.dynamic_rotate %246 by %c64_i32_73 dim 1 : vector<8x128xf32>, i32 -> vector<8x128xf32>
    %c96_i32_74 = arith.constant 96 : i32
    %248 = tpu.dynamic_rotate %246 by %c96_i32_74 dim 1 : vector<8x128xf32>, i32 -> vector<8x128xf32>
    %c32_i32_75 = arith.constant 32 : i32
    %249 = tpu.dynamic_rotate %246 by %c32_i32_75 dim 1 : vector<8x128xf32>, i32 -> vector<8x128xf32>
    %250 = arith.mulf %247, %234 : vector<8x128xf32>
    %251 = arith.mulf %248, %249 : vector<8x128xf32>
    %252 = arith.addf %250, %251 : vector<8x128xf32>
    %253 = math.tanh %252 : vector<8x128xf32>
    %254 = arith.mulf %246, %253 : vector<8x128xf32>
    %255 = vector.extract_strided_slice %162 {offsets = [40, 0], sizes = [8, 128], strides = [1, 1]} : vector<64x128xf32> to vector<8x128xf32>
    %cst_76 = arith.constant dense<0.000000e+00> : vector<8x128xf32>
    %256 = tpu.matmul %254, %158, %cst_76 {dimension_numbers = #tpu.dot_dimension_numbers<[1], [0], [0], [1], [0, 0, 1, 1], [], []>} : vector<8x128xf32>, vector<128x128xf32>, vector<8x128xf32> -> vector<8x128xf32>
    %257 = arith.addf %255, %256 : vector<8x128xf32>
    %258 = math.tanh %257 : vector<8x128xf32>
    %259 = arith.negf %257 : vector<8x128xf32>
    %260 = math.exp %259 : vector<8x128xf32>
    %cst_77 = arith.constant 1.000000e+00 : f32
    %261 = vector.broadcast %cst_77 : f32 to vector<8x128xf32>
    %262 = arith.addf %261, %260 : vector<8x128xf32>
    %263 = arith.divf %261, %262 : vector<8x128xf32>
    %264 = arith.select %2, %258, %263 : vector<8x128xi1>, vector<8x128xf32>
    %c64_i32_78 = arith.constant 64 : i32
    %265 = tpu.dynamic_rotate %264 by %c64_i32_78 dim 1 : vector<8x128xf32>, i32 -> vector<8x128xf32>
    %c96_i32_79 = arith.constant 96 : i32
    %266 = tpu.dynamic_rotate %264 by %c96_i32_79 dim 1 : vector<8x128xf32>, i32 -> vector<8x128xf32>
    %c32_i32_80 = arith.constant 32 : i32
    %267 = tpu.dynamic_rotate %264 by %c32_i32_80 dim 1 : vector<8x128xf32>, i32 -> vector<8x128xf32>
    %268 = arith.mulf %265, %252 : vector<8x128xf32>
    %269 = arith.mulf %266, %267 : vector<8x128xf32>
    %270 = arith.addf %268, %269 : vector<8x128xf32>
    %271 = math.tanh %270 : vector<8x128xf32>
    %272 = arith.mulf %264, %271 : vector<8x128xf32>
    %273 = vector.extract_strided_slice %162 {offsets = [48, 0], sizes = [8, 128], strides = [1, 1]} : vector<64x128xf32> to vector<8x128xf32>
    %cst_81 = arith.constant dense<0.000000e+00> : vector<8x128xf32>
    %274 = tpu.matmul %272, %158, %cst_81 {dimension_numbers = #tpu.dot_dimension_numbers<[1], [0], [0], [1], [0, 0, 1, 1], [], []>} : vector<8x128xf32>, vector<128x128xf32>, vector<8x128xf32> -> vector<8x128xf32>
    %275 = arith.addf %273, %274 : vector<8x128xf32>
    %276 = math.tanh %275 : vector<8x128xf32>
    %277 = arith.negf %275 : vector<8x128xf32>
    %278 = math.exp %277 : vector<8x128xf32>
    %cst_82 = arith.constant 1.000000e+00 : f32
    %279 = vector.broadcast %cst_82 : f32 to vector<8x128xf32>
    %280 = arith.addf %279, %278 : vector<8x128xf32>
    %281 = arith.divf %279, %280 : vector<8x128xf32>
    %282 = arith.select %2, %276, %281 : vector<8x128xi1>, vector<8x128xf32>
    %c64_i32_83 = arith.constant 64 : i32
    %283 = tpu.dynamic_rotate %282 by %c64_i32_83 dim 1 : vector<8x128xf32>, i32 -> vector<8x128xf32>
    %c96_i32_84 = arith.constant 96 : i32
    %284 = tpu.dynamic_rotate %282 by %c96_i32_84 dim 1 : vector<8x128xf32>, i32 -> vector<8x128xf32>
    %c32_i32_85 = arith.constant 32 : i32
    %285 = tpu.dynamic_rotate %282 by %c32_i32_85 dim 1 : vector<8x128xf32>, i32 -> vector<8x128xf32>
    %286 = arith.mulf %283, %270 : vector<8x128xf32>
    %287 = arith.mulf %284, %285 : vector<8x128xf32>
    %288 = arith.addf %286, %287 : vector<8x128xf32>
    %289 = math.tanh %288 : vector<8x128xf32>
    %290 = arith.mulf %282, %289 : vector<8x128xf32>
    %291 = vector.extract_strided_slice %162 {offsets = [56, 0], sizes = [8, 128], strides = [1, 1]} : vector<64x128xf32> to vector<8x128xf32>
    %cst_86 = arith.constant dense<0.000000e+00> : vector<8x128xf32>
    %292 = tpu.matmul %290, %158, %cst_86 {dimension_numbers = #tpu.dot_dimension_numbers<[1], [0], [0], [1], [0, 0, 1, 1], [], []>} : vector<8x128xf32>, vector<128x128xf32>, vector<8x128xf32> -> vector<8x128xf32>
    %293 = arith.addf %291, %292 : vector<8x128xf32>
    %294 = math.tanh %293 : vector<8x128xf32>
    %295 = arith.negf %293 : vector<8x128xf32>
    %296 = math.exp %295 : vector<8x128xf32>
    %cst_87 = arith.constant 1.000000e+00 : f32
    %297 = vector.broadcast %cst_87 : f32 to vector<8x128xf32>
    %298 = arith.addf %297, %296 : vector<8x128xf32>
    %299 = arith.divf %297, %298 : vector<8x128xf32>
    %300 = arith.select %2, %294, %299 : vector<8x128xi1>, vector<8x128xf32>
    %c64_i32_88 = arith.constant 64 : i32
    %301 = tpu.dynamic_rotate %300 by %c64_i32_88 dim 1 : vector<8x128xf32>, i32 -> vector<8x128xf32>
    %c96_i32_89 = arith.constant 96 : i32
    %302 = tpu.dynamic_rotate %300 by %c96_i32_89 dim 1 : vector<8x128xf32>, i32 -> vector<8x128xf32>
    %c32_i32_90 = arith.constant 32 : i32
    %303 = tpu.dynamic_rotate %300 by %c32_i32_90 dim 1 : vector<8x128xf32>, i32 -> vector<8x128xf32>
    %304 = arith.mulf %301, %288 : vector<8x128xf32>
    %305 = arith.mulf %302, %303 : vector<8x128xf32>
    %306 = arith.addf %304, %305 : vector<8x128xf32>
    %307 = math.tanh %306 : vector<8x128xf32>
    %308 = arith.mulf %300, %307 : vector<8x128xf32>
    %c528 = arith.constant 528 : index
    %c0_91 = arith.constant 0 : index
    %309 = vector.load %arg1[%c528, %c0_91] : memref<664x128xf32, #tpu.memory_space<vmem>>, vector<128x128xf32>
    %c656 = arith.constant 656 : index
    %c0_92 = arith.constant 0 : index
    %310 = vector.load %arg1[%c656, %c0_92] : memref<664x128xf32, #tpu.memory_space<vmem>>, vector<1x128xf32>
    %cst_93 = arith.constant dense<0.000000e+00> : vector<8x128xf32>
    %311 = tpu.matmul %308, %309, %cst_93 {dimension_numbers = #tpu.dot_dimension_numbers<[1], [0], [0], [1], [0, 0, 1, 1], [], []>} : vector<8x128xf32>, vector<128x128xf32>, vector<8x128xf32> -> vector<8x128xf32>
    %312 = vector.broadcast %310 : vector<1x128xf32> to vector<8x128xf32>
    %313 = arith.addf %311, %312 : vector<8x128xf32>
    %c0_94 = arith.constant 0 : index
    %c0_95 = arith.constant 0 : index
    %314 = vector.load %arg2[%c0_94, %c0_95] : memref<8x128xf32, #tpu.memory_space<vmem>>, vector<8x128xf32>
    tpu.vector_store %arg2[%c0_94, %c0_95], %313 {strides = array<i32>} : memref<8x128xf32, #tpu.memory_space<vmem>>, vector<8x128xf32>,
    return
  }
}

</mosaic_0001>

<llo_original>
// kernel: forward.1
$region0: #{forward.1}
  #allocation0 [shape = 'u32[]', space=smem, size = 0x4, offset = 0x4, fixed_abs, tag = 'smem constant byte address 0x4 - core index']
  #allocation1 [shape = 'u32[144,128]{1,0:T(1,128)}', space=vmem, size = 0x12000, scoped, tag = 'internal scratch']
  %s0 = inlined_call_operand.vmem [shape: f32[64,128], index: 0, kind: input, shape index: {}]
  %s1 = inlined_call_operand.hbm [shape: f32[664,128], index: 1, kind: input, shape index: {}]
  %s2 = inlined_call_operand.vmem [shape: f32[8,128], index: 2, kind: output, shape index: {}]
  %s3 = sld [smem:[#allocation0]]
  $region22: #{forward.1} parent=0
    _
  %s5 = ssub.s32 1, %s3
  %s6 = scalar_select 0, %s5, %s3
  $region1: #{forward.1} parent=0
    #allocation2 [shape = 'u8[339968]{0}', space=vmem, size = 0x53000, scoped, tag = 'input window, operand 1, single buffered']
    #allocation3 [shape = 's32[1]{0}', space=sflag, size = 0x4, scoped, tag = 'scoped memory for forward.1']
    %7 = vsyncpa [#allocation3], 0
    // Predicated region
    $region2: #{forward.1} parent=1 // pred_check
      _
    $region3: #{forward.1} parent=1 // pred_check_branch
      %9 = sbr.rel (0) target = $region5
    $region4: #{forward.1} parent=1 // pred_region
      _
    $region5: #{forward.1} parent=1 // pred_fallthru
      _
    // Predicated region
    $region6: #{forward.1} parent=1 // pred_check
      _
    $region7: #{forward.1} parent=1 // pred_check_branch
      %11 = sbr.rel (0) target = $region9
    $region8: #{forward.1} parent=1 // pred_region
      %s13 = ssub.s32 10624, 10624
      %14 = vsyncadd [#allocation3], %s13
      %s15 = sshll.u32 [#allocation2], 4
      %s16 = int_to_ptr.vmem [resolvable:$true] %s15
      %21 = dma.hbm_to_vmem [thread:$0]  %s1, 10624, %s16, [#allocation3], 128, 128, 8
    $region9: #{forward.1} parent=1 // pred_fallthru
      _
    // Predicated region
    $region10: #{forward.1} parent=1 // pred_check
      _
    $region11: #{forward.1} parent=1 // pred_check_branch
      %23 = sbr.rel (0) target = $region13
    $region12: #{forward.1} parent=1 // pred_region
      %24 = dma.done [#allocation3], 10624
    $region13: #{forward.1} parent=1 // pred_fallthru
      _
    %v25 = vlaneseq
    %v26 = vand.u32 %v25, 127
    %vm27 = vcmp.ge.s32.totalorder %v26, 96
    %v28 = vld [vmem:[%s0] sm:$0xff]
    %v29 = vld [vmem:[%s0 + $0x8] sm:$0xff]
    %v30 = vld [vmem:[%s0 + $0x10] sm:$0xff]
    %v31 = vld [vmem:[%s0 + $0x18] sm:$0xff]
    %v32 = vld [vmem:[%s0 + $0x20] sm:$0xff]
    %v33 = vld [vmem:[%s0 + $0x28] sm:$0xff]
    %v34 = vld [vmem:[%s0 + $0x30] sm:$0xff]
    %v35 = vld [vmem:[%s0 + $0x38] sm:$0xff]
    %v36 = vld [vmem:[#allocation2] sm:$0xff]
    %v37 = vld [vmem:[#allocation2 + $0x8] sm:$0xff]
    %v38 = vld [vmem:[#allocation2 + $0x10] sm:$0xff]
    %v39 = vld [vmem:[#allocation2 + $0x18] sm:$0xff]
    %v40 = vld [vmem:[#allocation2 + $0x20] sm:$0xff]
    %v41 = vld [vmem:[#allocation2 + $0x28] sm:$0xff]
    %v42 = vld [vmem:[#allocation2 + $0x30] sm:$0xff]
    %v43 = vld [vmem:[#allocation2 + $0x38] sm:$0xff]
    %v44 = vld [vmem:[#allocation2 + $0x40] sm:$0xff]
    %v45 = vld [vmem:[#allocation2 + $0x48] sm:$0xff]
    %v46 = vld [vmem:[#allocation2 + $0x50] sm:$0xff]
    %v47 = vld [vmem:[#allocation2 + $0x58] sm:$0xff]
    %v48 = vld [vmem:[#allocation2 + $0x60] sm:$0xff]
    %v49 = vld [vmem:[#allocation2 + $0x68] sm:$0xff]
    %v50 = vld [vmem:[#allocation2 + $0x70] sm:$0xff]
    %v51 = vld [vmem:[#allocation2 + $0x78] sm:$0xff]
    %v52 = vld [vmem:[#allocation2 + $0x80] sm:$0xff]
    %v53 = vld [vmem:[#allocation2 + $0x88] sm:$0xff]
    %v54 = vld [vmem:[#allocation2 + $0x90] sm:$0xff]
    %v55 = vld [vmem:[#allocation2 + $0x98] sm:$0xff]
    %v56 = vld [vmem:[#allocation2 + $0xa0] sm:$0xff]
    %v57 = vld [vmem:[#allocation2 + $0xa8] sm:$0xff]
    %v58 = vld [vmem:[#allocation2 + $0xb0] sm:$0xff]
    %v59 = vld [vmem:[#allocation2 + $0xb8] sm:$0xff]
    %v60 = vld [vmem:[#allocation2 + $0xc0] sm:$0xff]
    %v61 = vld [vmem:[#allocation2 + $0xc8] sm:$0xff]
    %v62 = vld [vmem:[#allocation2 + $0xd0] sm:$0xff]
    %v63 = vld [vmem:[#allocation2 + $0xd8] sm:$0xff]
    %v64 = vld [vmem:[#allocation2 + $0xe0] sm:$0xff]
    %v65 = vld [vmem:[#allocation2 + $0xe8] sm:$0xff]
    %v66 = vld [vmem:[#allocation2 + $0xf0] sm:$0xff]
    %v67 = vld [vmem:[#allocation2 + $0xf8] sm:$0xff]
    %v68 = vld [vmem:[#allocation2 + $0x100] sm:$0x1]
    %v69 = vlaneseq
    %v70 = vshrl.u32 %v69, 7
    %v71 = vsub.s32 0, %v70
    %v72 = vrot.slane %v68, %v71
    %73 = vmatprep.subr.mxu0 0.0
    %74 = vmatpush1.msra.mxu0 %v36
    %75 = vmatprep.subr.mxu0 0.0
    %76 = vmatpush1.msra.mxu0 %v37
    %77 = vmatprep.subr.mxu0 0.0
    %78 = vmatpush1.msra.mxu0 %v38
    %79 = vmatprep.subr.mxu0 0.0
    %80 = vmatpush1.msra.mxu0 %v39
    %81 = vmatprep.subr.mxu0 0.0
    %82 = vmatpush1.msra.mxu0 %v40
    %83 = vmatprep.subr.mxu0 0.0
    %84 = vmatpush1.msra.mxu0 %v41
    %85 = vmatprep.subr.mxu0 0.0
    %86 = vmatpush1.msra.mxu0 %v42
    %87 = vmatprep.subr.mxu0 0.0
    %88 = vmatpush1.msra.mxu0 %v43
    %89 = vmatprep.subr.mxu0 0.0
    %90 = vmatpush1.msra.mxu0 %v44
    %91 = vmatprep.subr.mxu0 0.0
    %92 = vmatpush1.msra.mxu0 %v45
    %93 = vmatprep.subr.mxu0 0.0
    %94 = vmatpush1.msra.mxu0 %v46
    %95 = vmatprep.subr.mxu0 0.0
    %96 = vmatpush1.msra.mxu0 %v47
    %97 = vmatprep.subr.mxu0 0.0
    %98 = vmatpush1.msra.mxu0 %v48
    %99 = vmatprep.subr.mxu0 0.0
    %100 = vmatpush1.msra.mxu0 %v49
    %101 = vmatprep.subr.mxu0 0.0
    %102 = vmatpush1.msra.mxu0 %v50
    %103 = vmatprep.subr.mxu0 0.0
    %104 = vmatpush1.msra.mxu0 %v51
    %105 = vmatprep.subr.mxu0 0.0
    %106 = vmatpush1.msra.mxu0 0.0
    %107 = vmatprep.subr.mxu0 0.0
    %108 = vmatpush1.msra.mxu0 0.0
    %109 = vmatprep.subr.mxu0 0.0
    %110 = vmatpush1.msra.mxu0 0.0
    %111 = vmatprep.subr.mxu0 0.0
    %112 = vmatpush1.msra.mxu0 0.0
    %113 = vmatprep.subr.mxu0 0.0
    %114 = vmatpush1.msra.mxu0 0.0
    %115 = vmatprep.subr.mxu0 0.0
    %116 = vmatpush1.msra.mxu0 0.0
    %117 = vmatprep.subr.mxu0 0.0
    %118 = vmatpush1.msra.mxu0 0.0
    %119 = vmatprep.subr.mxu0 0.0
    %120 = vmatpush1.msra.mxu0 0.0
    %121 = vmatprep.subr.mxu0 0.0
    %122 = vmatpush1.msra.mxu0 0.0
    %123 = vmatprep.subr.mxu0 0.0
    %124 = vmatpush1.msra.mxu0 0.0
    %125 = vmatprep.subr.mxu0 0.0
    %126 = vmatpush1.msra.mxu0 0.0
    %127 = vmatprep.subr.mxu0 0.0
    %128 = vmatpush1.msra.mxu0 0.0
    %129 = vmatprep.subr.mxu0 0.0
    %130 = vmatpush1.msra.mxu0 0.0
    %131 = vmatprep.subr.mxu0 0.0
    %132 = vmatpush1.msra.mxu0 0.0
    %133 = vmatprep.subr.mxu0 0.0
    %134 = vmatpush1.msra.mxu0 0.0
    %135 = vmatprep.subr.mxu0 0.0
    %136 = vmatpush1.msra.mxu0 0.0
    %137 = vmatprep.mubr.f32.mxu0 0.0
    %138 = vmatmul.mubr.f32.gmra.mrb[0].mxu0 %v28
    %v139 = vpop.f32.mrb[0].mxu0
    %v140 = vadd.f32 %v72, %v139
    %v141 = vpop.f32.mrb[0].mxu0
    %142 = vmatprep.mubr.f32.mxu0 0.0
    %143 = vmatmul.mubr.f32.gmra.mrb[0].mxu0 %v29
    %v144 = vpop.f32.mrb[0].mxu0
    %v145 = vadd.f32 %v72, %v144
    %v146 = vpop.f32.mrb[0].mxu0
    %147 = vmatprep.mubr.f32.mxu0 0.0
    %148 = vmatmul.mubr.f32.gmra.mrb[0].mxu0 %v30
    %v149 = vpop.f32.mrb[0].mxu0
    %v150 = vadd.f32 %v72, %v149
    %v151 = vpop.f32.mrb[0].mxu0
    %152 = vmatprep.mubr.f32.mxu0 0.0
    %153 = vmatmul.mubr.f32.gmra.mrb[0].mxu0 %v31
    %v154 = vpop.f32.mrb[0].mxu0
    %v155 = vadd.f32 %v72, %v154
    %v156 = vpop.f32.mrb[0].mxu0
    %157 = vmatprep.mubr.f32.mxu0 0.0
    %158 = vmatmul.mubr.f32.gmra.mrb[0].mxu0 %v32
    %v159 = vpop.f32.mrb[0].mxu0
    %v160 = vadd.f32 %v72, %v159
    %v161 = vpop.f32.mrb[0].mxu0
    %162 = vmatprep.mubr.f32.mxu0 0.0
    %163 = vmatmul.mubr.f32.gmra.mrb[0].mxu0 %v33
    %v164 = vpop.f32.mrb[0].mxu0
    %v165 = vadd.f32 %v72, %v164
    %v166 = vpop.f32.mrb[0].mxu0
    %167 = vmatprep.mubr.f32.mxu0 0.0
    %168 = vmatmul.mubr.f32.gmra.mrb[0].mxu0 %v34
    %v169 = vpop.f32.mrb[0].mxu0
    %v170 = vadd.f32 %v72, %v169
    %v171 = vpop.f32.mrb[0].mxu0
    %172 = vmatprep.mubr.f32.mxu0 0.0
    %173 = vmatmul.mubr.f32.gmra.mrb[0].mxu0 %v35
    %v174 = vpop.f32.mrb[0].mxu0
    %v175 = vadd.f32 %v72, %v174
    %v176 = vpop.f32.mrb[0].mxu0
    %177 = vdwg.mxu0
    %178 = vmatprep.subr.mxu0 0.0
    %179 = vmatpush1.msra.mxu0 %v52
    %180 = vmatprep.subr.mxu0 0.0
    %181 = vmatpush1.msra.mxu0 %v53
    %182 = vmatprep.subr.mxu0 0.0
    %183 = vmatpush1.msra.mxu0 %v54
    %184 = vmatprep.subr.mxu0 0.0
    %185 = vmatpush1.msra.mxu0 %v55
    %186 = vmatprep.subr.mxu0 0.0
    %187 = vmatpush1.msra.mxu0 %v56
    %188 = vmatprep.subr.mxu0 0.0
    %189 = vmatpush1.msra.mxu0 %v57
    %190 = vmatprep.subr.mxu0 0.0
    %191 = vmatpush1.msra.mxu0 %v58
    %192 = vmatprep.subr.mxu0 0.0
    %193 = vmatpush1.msra.mxu0 %v59
    %194 = vmatprep.subr.mxu0 0.0
    %195 = vmatpush1.msra.mxu0 %v60
    %196 = vmatprep.subr.mxu0 0.0
    %197 = vmatpush1.msra.mxu0 %v61
    %198 = vmatprep.subr.mxu0 0.0
    %199 = vmatpush1.msra.mxu0 %v62
    %200 = vmatprep.subr.mxu0 0.0
    %201 = vmatpush1.msra.mxu0 %v63
    %202 = vmatprep.subr.mxu0 0.0
    %203 = vmatpush1.msra.mxu0 %v64
    %204 = vmatprep.subr.mxu0 0.0
    %205 = vmatpush1.msra.mxu0 %v65
    %206 = vmatprep.subr.mxu0 0.0
    %207 = vmatpush1.msra.mxu0 %v66
    %208 = vmatprep.subr.mxu0 0.0
    %209 = vmatpush1.msra.mxu0 %v67
    %210 = vmatprep.subr.mxu0 0.0
    %211 = vmatpush1.msra.mxu0 0.0
    %212 = vmatprep.subr.mxu0 0.0
    %213 = vmatpush1.msra.mxu0 0.0
    %214 = vmatprep.subr.mxu0 0.0
    %215 = vmatpush1.msra.mxu0 0.0
    %216 = vmatprep.subr.mxu0 0.0
    %217 = vmatpush1.msra.mxu0 0.0
    %218 = vmatprep.subr.mxu0 0.0
    %219 = vmatpush1.msra.mxu0 0.0
    %220 = vmatprep.subr.mxu0 0.0
    %221 = vmatpush1.msra.mxu0 0.0
    %222 = vmatprep.subr.mxu0 0.0
    %223 = vmatpush1.msra.mxu0 0.0
    %224 = vmatprep.subr.mxu0 0.0
    %225 = vmatpush1.msra.mxu0 0.0
    %226 = vmatprep.subr.mxu0 0.0
    %227 = vmatpush1.msra.mxu0 0.0
    %228 = vmatprep.subr.mxu0 0.0
    %229 = vmatpush1.msra.mxu0 0.0
    %230 = vmatprep.subr.mxu0 0.0
    %231 = vmatpush1.msra.mxu0 0.0
    %232 = vmatprep.subr.mxu0 0.0
    %233 = vmatpush1.msra.mxu0 0.0
    %234 = vmatprep.subr.mxu0 0.0
    %235 = vmatpush1.msra.mxu0 0.0
    %236 = vmatprep.subr.mxu0 0.0
    %237 = vmatpush1.msra.mxu0 0.0
    %238 = vmatprep.subr.mxu0 0.0
    %239 = vmatpush1.msra.mxu0 0.0
    %240 = vmatprep.subr.mxu0 0.0
    %241 = vmatpush1.msra.mxu0 0.0
    %242 = vmatprep.mubr.f32.mxu0 0.0
    %243 = vmatmul.mubr.f32.gmra.mrb[0].mxu0 0.0
    %v244 = vpop.f32.mrb[0].mxu0
    %v245 = vadd.f32 0.0, %v244
    %v246 = vpop.f32.mrb[0].mxu0
    %247 = vdwg.mxu0
    %v248 = vadd.f32 %v140, %v245
    %v249 = vtanh.pop %v248
    %v250 = vxor.u32 %v248, 2147483648
    %v251 = vmul.f32 %v250, 1.442695
    %v252 = vpow.pop %v251
    %v253 = vadd.f32 %v252, 1.0
    %v254 = vrcp.pop %v253
    %v255 = vmul.f32 1.0, %v254
    %v256 = vsel %vm27, %v249, %v255
    %257 = vrot.lane.b32.xlu0 %v256, 64
    %v258 = vpop.permute.xlu0 %257
    %259 = vrot.lane.b32.xlu0 %v256, 96
    %v260 = vpop.permute.xlu0 %259
    %261 = vrot.lane.b32.xlu0 %v256, 32
    %v262 = vpop.permute.xlu0 %261
    %v263 = vmul.f32 %v258, 0.0
    %v264 = vmul.f32 %v260, %v262
    %v265 = vadd.f32 %v263, %v264
    %v266 = vtanh.pop %v265
    %v267 = vmul.f32 %v256, %v266
    %268 = vmatprep.subr.mxu0 0.0
    %269 = vmatpush1.msra.mxu0 %v52
    %270 = vmatprep.subr.mxu0 0.0
    %271 = vmatpush1.msra.mxu0 %v53
    %272 = vmatprep.subr.mxu0 0.0
    %273 = vmatpush1.msra.mxu0 %v54
    %274 = vmatprep.subr.mxu0 0.0
    %275 = vmatpush1.msra.mxu0 %v55
    %276 = vmatprep.subr.mxu0 0.0
    %277 = vmatpush1.msra.mxu0 %v56
    %278 = vmatprep.subr.mxu0 0.0
    %279 = vmatpush1.msra.mxu0 %v57
    %280 = vmatprep.subr.mxu0 0.0
    %281 = vmatpush1.msra.mxu0 %v58
    %282 = vmatprep.subr.mxu0 0.0
    %283 = vmatpush1.msra.mxu0 %v59
    %284 = vmatprep.subr.mxu0 0.0
    %285 = vmatpush1.msra.mxu0 %v60
    %286 = vmatprep.subr.mxu0 0.0
    %287 = vmatpush1.msra.mxu0 %v61
    %288 = vmatprep.subr.mxu0 0.0
    %289 = vmatpush1.msra.mxu0 %v62
    %290 = vmatprep.subr.mxu0 0.0
    %291 = vmatpush1.msra.mxu0 %v63
    %292 = vmatprep.subr.mxu0 0.0
    %293 = vmatpush1.msra.mxu0 %v64
    %294 = vmatprep.subr.mxu0 0.0
    %295 = vmatpush1.msra.mxu0 %v65
    %296 = vmatprep.subr.mxu0 0.0
    %297 = vmatpush1.msra.mxu0 %v66
    %298 = vmatprep.subr.mxu0 0.0
    %299 = vmatpush1.msra.mxu0 %v67
    %300 = vmatprep.subr.mxu0 0.0
    %301 = vmatpush1.msra.mxu0 0.0
    %302 = vmatprep.subr.mxu0 0.0
    %303 = vmatpush1.msra.mxu0 0.0
    %304 = vmatprep.subr.mxu0 0.0
    %305 = vmatpush1.msra.mxu0 0.0
    %306 = vmatprep.subr.mxu0 0.0
    %307 = vmatpush1.msra.mxu0 0.0
    %308 = vmatprep.subr.mxu0 0.0
    %309 = vmatpush1.msra.mxu0 0.0
    %310 = vmatprep.subr.mxu0 0.0
    %311 = vmatpush1.msra.mxu0 0.0
    %312 = vmatprep.subr.mxu0 0.0
    %313 = vmatpush1.msra.mxu0 0.0
    %314 = vmatprep.subr.mxu0 0.0
    %315 = vmatpush1.msra.mxu0 0.0
    %316 = vmatprep.subr.mxu0 0.0
    %317 = vmatpush1.msra.mxu0 0.0
    %318 = vmatprep.subr.mxu0 0.0
    %319 = vmatpush1.msra.mxu0 0.0
    %320 = vmatprep.subr.mxu0 0.0
    %321 = vmatpush1.msra.mxu0 0.0
    %322 = vmatprep.subr.mxu0 0.0
    %323 = vmatpush1.msra.mxu0 0.0
    %324 = vmatprep.subr.mxu0 0.0
    %325 = vmatpush1.msra.mxu0 0.0
    %326 = vmatprep.subr.mxu0 0.0
    %327 = vmatpush1.msra.mxu0 0.0
    %328 = vmatprep.subr.mxu0 0.0
    %329 = vmatpush1.msra.mxu0 0.0
    %330 = vmatprep.subr.mxu0 0.0
    %331 = vmatpush1.msra.mxu0 0.0
    %332 = vmatprep.mubr.f32.mxu0 0.0
    %333 = vmatmul.mubr.f32.gmra.mrb[0].mxu0 %v267
    %v334 = vpop.f32.mrb[0].mxu0
    %v335 = vadd.f32 0.0, %v334
    %v336 = vpop.f32.mrb[0].mxu0
    %337 = vdwg.mxu0
    %v338 = vadd.f32 %v145, %v335
    %v339 = vtanh.pop %v338
    %v340 = vxor.u32 %v338, 2147483648
    %v341 = vmul.f32 %v340, 1.442695
    %v342 = vpow.pop %v341
    %v343 = vadd.f32 %v342, 1.0
    %v344 = vrcp.pop %v343
    %v345 = vmul.f32 1.0, %v344
    %v346 = vsel %vm27, %v339, %v345
    %347 = vrot.lane.b32.xlu0 %v346, 64
    %v348 = vpop.permute.xlu0 %347
    %349 = vrot.lane.b32.xlu0 %v346, 96
    %v350 = vpop.permute.xlu0 %349
    %351 = vrot.lane.b32.xlu0 %v346, 32
    %v352 = vpop.permute.xlu0 %351
    %v353 = vmul.f32 %v348, %v265
    %v354 = vmul.f32 %v350, %v352
    %v355 = vadd.f32 %v353, %v354
    %v356 = vtanh.pop %v355
    %v357 = vmul.f32 %v346, %v356
    %358 = vmatprep.subr.mxu0 0.0
    %359 = vmatpush1.msra.mxu0 %v52
    %360 = vmatprep.subr.mxu0 0.0
    %361 = vmatpush1.msra.mxu0 %v53
    %362 = vmatprep.subr.mxu0 0.0
    %363 = vmatpush1.msra.mxu0 %v54
    %364 = vmatprep.subr.mxu0 0.0
    %365 = vmatpush1.msra.mxu0 %v55
    %366 = vmatprep.subr.mxu0 0.0
    %367 = vmatpush1.msra.mxu0 %v56
    %368 = vmatprep.subr.mxu0 0.0
    %369 = vmatpush1.msra.mxu0 %v57
    %370 = vmatprep.subr.mxu0 0.0
    %371 = vmatpush1.msra.mxu0 %v58
    %372 = vmatprep.subr.mxu0 0.0
    %373 = vmatpush1.msra.mxu0 %v59
    %374 = vmatprep.subr.mxu0 0.0
    %375 = vmatpush1.msra.mxu0 %v60
    %376 = vmatprep.subr.mxu0 0.0
    %377 = vmatpush1.msra.mxu0 %v61
    %378 = vmatprep.subr.mxu0 0.0
    %379 = vmatpush1.msra.mxu0 %v62
    %380 = vmatprep.subr.mxu0 0.0
    %381 = vmatpush1.msra.mxu0 %v63
    %382 = vmatprep.subr.mxu0 0.0
    %383 = vmatpush1.msra.mxu0 %v64
    %384 = vmatprep.subr.mxu0 0.0
    %385 = vmatpush1.msra.mxu0 %v65
    %386 = vmatprep.subr.mxu0 0.0
    %387 = vmatpush1.msra.mxu0 %v66
    %388 = vmatprep.subr.mxu0 0.0
    %389 = vmatpush1.msra.mxu0 %v67
    %390 = vmatprep.subr.mxu0 0.0
    %391 = vmatpush1.msra.mxu0 0.0
    %392 = vmatprep.subr.mxu0 0.0
    %393 = vmatpush1.msra.mxu0 0.0
    %394 = vmatprep.subr.mxu0 0.0
    %395 = vmatpush1.msra.mxu0 0.0
    %396 = vmatprep.subr.mxu0 0.0
    %397 = vmatpush1.msra.mxu0 0.0
    %398 = vmatprep.subr.mxu0 0.0
    %399 = vmatpush1.msra.mxu0 0.0
    %400 = vmatprep.subr.mxu0 0.0
    %401 = vmatpush1.msra.mxu0 0.0
    %402 = vmatprep.subr.mxu0 0.0
    %403 = vmatpush1.msra.mxu0 0.0
    %404 = vmatprep.subr.mxu0 0.0
    %405 = vmatpush1.msra.mxu0 0.0
    %406 = vmatprep.subr.mxu0 0.0
    %407 = vmatpush1.msra.mxu0 0.0
    %408 = vmatprep.subr.mxu0 0.0
    %409 = vmatpush1.msra.mxu0 0.0
    %410 = vmatprep.subr.mxu0 0.0
    %411 = vmatpush1.msra.mxu0 0.0
    %412 = vmatprep.subr.mxu0 0.0
    %413 = vmatpush1.msra.mxu0 0.0
    %414 = vmatprep.subr.mxu0 0.0
    %415 = vmatpush1.msra.mxu0 0.0
    %416 = vmatprep.subr.mxu0 0.0
    %417 = vmatpush1.msra.mxu0 0.0
    %418 = vmatprep.subr.mxu0 0.0
    %419 = vmatpush1.msra.mxu0 0.0
    %420 = vmatprep.subr.mxu0 0.0
    %421 = vmatpush1.msra.mxu0 0.0
    %422 = vmatprep.mubr.f32.mxu0 0.0
    %423 = vmatmul.mubr.f32.gmra.mrb[0].mxu0 %v357
    %v424 = vpop.f32.mrb[0].mxu0
    %v425 = vadd.f32 0.0, %v424
    %v426 = vpop.f32.mrb[0].mxu0
    %427 = vdwg.mxu0
    %v428 = vadd.f32 %v150, %v425
    %v429 = vtanh.pop %v428
    %v430 = vxor.u32 %v428, 2147483648
    %v431 = vmul.f32 %v430, 1.442695
    %v432 = vpow.pop %v431
    %v433 = vadd.f32 %v432, 1.0
    %v434 = vrcp.pop %v433
    %v435 = vmul.f32 1.0, %v434
    %v436 = vsel %vm27, %v429, %v435
    %437 = vrot.lane.b32.xlu0 %v436, 64
    %v438 = vpop.permute.xlu0 %437
    %439 = vrot.lane.b32.xlu0 %v436, 96
    %v440 = vpop.permute.xlu0 %439
    %441 = vrot.lane.b32.xlu0 %v436, 32
    %v442 = vpop.permute.xlu0 %441
    %v443 = vmul.f32 %v438, %v355
    %v444 = vmul.f32 %v440, %v442
    %v445 = vadd.f32 %v443, %v444
    %v446 = vtanh.pop %v445
    %v447 = vmul.f32 %v436, %v446
    %448 = vmatprep.subr.mxu0 0.0
    %449 = vmatpush1.msra.mxu0 %v52
    %450 = vmatprep.subr.mxu0 0.0
    %451 = vmatpush1.msra.mxu0 %v53
    %452 = vmatprep.subr.mxu0 0.0
    %453 = vmatpush1.msra.mxu0 %v54
    %454 = vmatprep.subr.mxu0 0.0
    %455 = vmatpush1.msra.mxu0 %v55
    %456 = vmatprep.subr.mxu0 0.0
    %457 = vmatpush1.msra.mxu0 %v56
    %458 = vmatprep.subr.mxu0 0.0
    %459 = vmatpush1.msra.mxu0 %v57
    %460 = vmatprep.subr.mxu0 0.0
    %461 = vmatpush1.msra.mxu0 %v58
    %462 = vmatprep.subr.mxu0 0.0
    %463 = vmatpush1.msra.mxu0 %v59
    %464 = vmatprep.subr.mxu0 0.0
    %465 = vmatpush1.msra.mxu0 %v60
    %466 = vmatprep.subr.mxu0 0.0
    %467 = vmatpush1.msra.mxu0 %v61
    %468 = vmatprep.subr.mxu0 0.0
    %469 = vmatpush1.msra.mxu0 %v62
    %470 = vmatprep.subr.mxu0 0.0
    %471 = vmatpush1.msra.mxu0 %v63
    %472 = vmatprep.subr.mxu0 0.0
    %473 = vmatpush1.msra.mxu0 %v64
    %474 = vmatprep.subr.mxu0 0.0
    %475 = vmatpush1.msra.mxu0 %v65
    %476 = vmatprep.subr.mxu0 0.0
    %477 = vmatpush1.msra.mxu0 %v66
    %478 = vmatprep.subr.mxu0 0.0
    %479 = vmatpush1.msra.mxu0 %v67
    %480 = vmatprep.subr.mxu0 0.0
    %481 = vmatpush1.msra.mxu0 0.0
    %482 = vmatprep.subr.mxu0 0.0
    %483 = vmatpush1.msra.mxu0 0.0
    %484 = vmatprep.subr.mxu0 0.0
    %485 = vmatpush1.msra.mxu0 0.0
    %486 = vmatprep.subr.mxu0 0.0
    %487 = vmatpush1.msra.mxu0 0.0
    %488 = vmatprep.subr.mxu0 0.0
    %489 = vmatpush1.msra.mxu0 0.0
    %490 = vmatprep.subr.mxu0 0.0
    %491 = vmatpush1.msra.mxu0 0.0
    %492 = vmatprep.subr.mxu0 0.0
    %493 = vmatpush1.msra.mxu0 0.0
    %494 = vmatprep.subr.mxu0 0.0
    %495 = vmatpush1.msra.mxu0 0.0
    %496 = vmatprep.subr.mxu0 0.0
    %497 = vmatpush1.msra.mxu0 0.0
    %498 = vmatprep.subr.mxu0 0.0
    %499 = vmatpush1.msra.mxu0 0.0
    %500 = vmatprep.subr.mxu0 0.0
    %501 = vmatpush1.msra.mxu0 0.0
    %502 = vmatprep.subr.mxu0 0.0
    %503 = vmatpush1.msra.mxu0 0.0
    %504 = vmatprep.subr.mxu0 0.0
    %505 = vmatpush1.msra.mxu0 0.0
    %506 = vmatprep.subr.mxu0 0.0
    %507 = vmatpush1.msra.mxu0 0.0
    %508 = vmatprep.subr.mxu0 0.0
    %509 = vmatpush1.msra.mxu0 0.0
    %510 = vmatprep.subr.mxu0 0.0
    %511 = vmatpush1.msra.mxu0 0.0
    %512 = vmatprep.mubr.f32.mxu0 0.0
    %513 = vmatmul.mubr.f32.gmra.mrb[0].mxu0 %v447
    %v514 = vpop.f32.mrb[0].mxu0
    %v515 = vadd.f32 0.0, %v514
    %v516 = vpop.f32.mrb[0].mxu0
    %517 = vdwg.mxu0
    %v518 = vadd.f32 %v155, %v515
    %v519 = vtanh.pop %v518
    %v520 = vxor.u32 %v518, 2147483648
    %v521 = vmul.f32 %v520, 1.442695
    %v522 = vpow.pop %v521
    %v523 = vadd.f32 %v522, 1.0
    %v524 = vrcp.pop %v523
    %v525 = vmul.f32 1.0, %v524
    %v526 = vsel %vm27, %v519, %v525
    %527 = vrot.lane.b32.xlu0 %v526, 64
    %v528 = vpop.permute.xlu0 %527
    %529 = vrot.lane.b32.xlu0 %v526, 96
    %v530 = vpop.permute.xlu0 %529
    %531 = vrot.lane.b32.xlu0 %v526, 32
    %v532 = vpop.permute.xlu0 %531
    %v533 = vmul.f32 %v528, %v445
    %v534 = vmul.f32 %v530, %v532
    %v535 = vadd.f32 %v533, %v534
    %v536 = vtanh.pop %v535
    %v537 = vmul.f32 %v526, %v536
    %538 = vmatprep.subr.mxu0 0.0
    %539 = vmatpush1.msra.mxu0 %v52
    %540 = vmatprep.subr.mxu0 0.0
    %541 = vmatpush1.msra.mxu0 %v53
    %542 = vmatprep.subr.mxu0 0.0
    %543 = vmatpush1.msra.mxu0 %v54
    %544 = vmatprep.subr.mxu0 0.0
    %545 = vmatpush1.msra.mxu0 %v55
    %546 = vmatprep.subr.mxu0 0.0
    %547 = vmatpush1.msra.mxu0 %v56
    %548 = vmatprep.subr.mxu0 0.0
    %549 = vmatpush1.msra.mxu0 %v57
    %550 = vmatprep.subr.mxu0 0.0
    %551 = vmatpush1.msra.mxu0 %v58
    %552 = vmatprep.subr.mxu0 0.0
    %553 = vmatpush1.msra.mxu0 %v59
    %554 = vmatprep.subr.mxu0 0.0
    %555 = vmatpush1.msra.mxu0 %v60
    %556 = vmatprep.subr.mxu0 0.0
    %557 = vmatpush1.msra.mxu0 %v61
    %558 = vmatprep.subr.mxu0 0.0
    %559 = vmatpush1.msra.mxu0 %v62
    %560 = vmatprep.subr.mxu0 0.0
    %561 = vmatpush1.msra.mxu0 %v63
    %562 = vmatprep.subr.mxu0 0.0
    %563 = vmatpush1.msra.mxu0 %v64
    %564 = vmatprep.subr.mxu0 0.0
    %565 = vmatpush1.msra.mxu0 %v65
    %566 = vmatprep.subr.mxu0 0.0
    %567 = vmatpush1.msra.mxu0 %v66
    %568 = vmatprep.subr.mxu0 0.0
    %569 = vmatpush1.msra.mxu0 %v67
    %570 = vmatprep.subr.mxu0 0.0
    %571 = vmatpush1.msra.mxu0 0.0
    %572 = vmatprep.subr.mxu0 0.0
    %573 = vmatpush1.msra.mxu0 0.0
    %574 = vmatprep.subr.mxu0 0.0
    %575 = vmatpush1.msra.mxu0 0.0
    %576 = vmatprep.subr.mxu0 0.0
    %577 = vmatpush1.msra.mxu0 0.0
    %578 = vmatprep.subr.mxu0 0.0
    %579 = vmatpush1.msra.mxu0 0.0
    %580 = vmatprep.subr.mxu0 0.0
    %581 = vmatpush1.msra.mxu0 0.0
    %582 = vmatprep.subr.mxu0 0.0
    %583 = vmatpush1.msra.mxu0 0.0
    %584 = vmatprep.subr.mxu0 0.0
    %585 = vmatpush1.msra.mxu0 0.0
    %586 = vmatprep.subr.mxu0 0.0
    %587 = vmatpush1.msra.mxu0 0.0
    %588 = vmatprep.subr.mxu0 0.0
    %589 = vmatpush1.msra.mxu0 0.0
    %590 = vmatprep.subr.mxu0 0.0
    %591 = vmatpush1.msra.mxu0 0.0
    %592 = vmatprep.subr.mxu0 0.0
    %593 = vmatpush1.msra.mxu0 0.0
    %594 = vmatprep.subr.mxu0 0.0
    %595 = vmatpush1.msra.mxu0 0.0
    %596 = vmatprep.subr.mxu0 0.0
    %597 = vmatpush1.msra.mxu0 0.0
    %598 = vmatprep.subr.mxu0 0.0
    %599 = vmatpush1.msra.mxu0 0.0
    %600 = vmatprep.subr.mxu0 0.0
    %601 = vmatpush1.msra.mxu0 0.0
    %602 = vmatprep.mubr.f32.mxu0 0.0
    %603 = vmatmul.mubr.f32.gmra.mrb[0].mxu0 %v537
    %v604 = vpop.f32.mrb[0].mxu0
    %v605 = vadd.f32 0.0, %v604
    %v606 = vpop.f32.mrb[0].mxu0
    %607 = vdwg.mxu0
    %v608 = vadd.f32 %v160, %v605
    %v609 = vtanh.pop %v608
    %v610 = vxor.u32 %v608, 2147483648
    %v611 = vmul.f32 %v610, 1.442695
    %v612 = vpow.pop %v611
    %v613 = vadd.f32 %v612, 1.0
    %v614 = vrcp.pop %v613
    %v615 = vmul.f32 1.0, %v614
    %v616 = vsel %vm27, %v609, %v615
    %617 = vrot.lane.b32.xlu0 %v616, 64
    %v618 = vpop.permute.xlu0 %617
    %619 = vrot.lane.b32.xlu0 %v616, 96
    %v620 = vpop.permute.xlu0 %619
    %621 = vrot.lane.b32.xlu0 %v616, 32
    %v622 = vpop.permute.xlu0 %621
    %v623 = vmul.f32 %v618, %v535
    %v624 = vmul.f32 %v620, %v622
    %v625 = vadd.f32 %v623, %v624
    %v626 = vtanh.pop %v625
    %v627 = vmul.f32 %v616, %v626
    %628 = vmatprep.subr.mxu0 0.0
    %629 = vmatpush1.msra.mxu0 %v52
    %630 = vmatprep.subr.mxu0 0.0
    %631 = vmatpush1.msra.mxu0 %v53
    %632 = vmatprep.subr.mxu0 0.0
    %633 = vmatpush1.msra.mxu0 %v54
    %634 = vmatprep.subr.mxu0 0.0
    %635 = vmatpush1.msra.mxu0 %v55
    %636 = vmatprep.subr.mxu0 0.0
    %637 = vmatpush1.msra.mxu0 %v56
    %638 = vmatprep.subr.mxu0 0.0
    %639 = vmatpush1.msra.mxu0 %v57
    %640 = vmatprep.subr.mxu0 0.0
    %641 = vmatpush1.msra.mxu0 %v58
    %642 = vmatprep.subr.mxu0 0.0
    %643 = vmatpush1.msra.mxu0 %v59
    %644 = vmatprep.subr.mxu0 0.0
    %645 = vmatpush1.msra.mxu0 %v60
    %646 = vmatprep.subr.mxu0 0.0
    %647 = vmatpush1.msra.mxu0 %v61
    %648 = vmatprep.subr.mxu0 0.0
    %649 = vmatpush1.msra.mxu0 %v62
    %650 = vmatprep.subr.mxu0 0.0
    %651 = vmatpush1.msra.mxu0 %v63
    %652 = vmatprep.subr.mxu0 0.0
    %653 = vmatpush1.msra.mxu0 %v64
    %654 = vmatprep.subr.mxu0 0.0
    %655 = vmatpush1.msra.mxu0 %v65
    %656 = vmatprep.subr.mxu0 0.0
    %657 = vmatpush1.msra.mxu0 %v66
    %658 = vmatprep.subr.mxu0 0.0
    %659 = vmatpush1.msra.mxu0 %v67
    %660 = vmatprep.subr.mxu0 0.0
    %661 = vmatpush1.msra.mxu0 0.0
    %662 = vmatprep.subr.mxu0 0.0
    %663 = vmatpush1.msra.mxu0 0.0
    %664 = vmatprep.subr.mxu0 0.0
    %665 = vmatpush1.msra.mxu0 0.0
    %666 = vmatprep.subr.mxu0 0.0
    %667 = vmatpush1.msra.mxu0 0.0
    %668 = vmatprep.subr.mxu0 0.0
    %669 = vmatpush1.msra.mxu0 0.0
    %670 = vmatprep.subr.mxu0 0.0
    %671 = vmatpush1.msra.mxu0 0.0
    %672 = vmatprep.subr.mxu0 0.0
    %673 = vmatpush1.msra.mxu0 0.0
    %674 = vmatprep.subr.mxu0 0.0
    %675 = vmatpush1.msra.mxu0 0.0
    %676 = vmatprep.subr.mxu0 0.0
    %677 = vmatpush1.msra.mxu0 0.0
    %678 = vmatprep.subr.mxu0 0.0
    %679 = vmatpush1.msra.mxu0 0.0
    %680 = vmatprep.subr.mxu0 0.0
    %681 = vmatpush1.msra.mxu0 0.0
    %682 = vmatprep.subr.mxu0 0.0
    %683 = vmatpush1.msra.mxu0 0.0
    %684 = vmatprep.subr.mxu0 0.0
    %685 = vmatpush1.msra.mxu0 0.0
    %686 = vmatprep.subr.mxu0 0.0
    %687 = vmatpush1.msra.mxu0 0.0
    %688 = vmatprep.subr.mxu0 0.0
    %689 = vmatpush1.msra.mxu0 0.0
    %690 = vmatprep.subr.mxu0 0.0
    %691 = vmatpush1.msra.mxu0 0.0
    %692 = vmatprep.mubr.f32.mxu0 0.0
    %693 = vmatmul.mubr.f32.gmra.mrb[0].mxu0 %v627
    %v694 = vpop.f32.mrb[0].mxu0
    %v695 = vadd.f32 0.0, %v694
    %v696 = vpop.f32.mrb[0].mxu0
    %697 = vdwg.mxu0
    %v698 = vadd.f32 %v165, %v695
    %v699 = vtanh.pop %v698
    %v700 = vxor.u32 %v698, 2147483648
    %v701 = vmul.f32 %v700, 1.442695
    %v702 = vpow.pop %v701
    %v703 = vadd.f32 %v702, 1.0
    %v704 = vrcp.pop %v703
    %v705 = vmul.f32 1.0, %v704
    %v706 = vsel %vm27, %v699, %v705
    %707 = vrot.lane.b32.xlu0 %v706, 64
    %v708 = vpop.permute.xlu0 %707
    %709 = vrot.lane.b32.xlu0 %v706, 96
    %v710 = vpop.permute.xlu0 %709
    %711 = vrot.lane.b32.xlu0 %v706, 32
    %v712 = vpop.permute.xlu0 %711
    %v713 = vmul.f32 %v708, %v625
    %v714 = vmul.f32 %v710, %v712
    %v715 = vadd.f32 %v713, %v714
    %v716 = vtanh.pop %v715
    %v717 = vmul.f32 %v706, %v716
    %718 = vmatprep.subr.mxu0 0.0
    %719 = vmatpush1.msra.mxu0 %v52
    %720 = vmatprep.subr.mxu0 0.0
    %721 = vmatpush1.msra.mxu0 %v53
    %722 = vmatprep.subr.mxu0 0.0
    %723 = vmatpush1.msra.mxu0 %v54
    %724 = vmatprep.subr.mxu0 0.0
    %725 = vmatpush1.msra.mxu0 %v55
    %726 = vmatprep.subr.mxu0 0.0
    %727 = vmatpush1.msra.mxu0 %v56
    %728 = vmatprep.subr.mxu0 0.0
    %729 = vmatpush1.msra.mxu0 %v57
    %730 = vmatprep.subr.mxu0 0.0
    %731 = vmatpush1.msra.mxu0 %v58
    %732 = vmatprep.subr.mxu0 0.0
    %733 = vmatpush1.msra.mxu0 %v59
    %734 = vmatprep.subr.mxu0 0.0
    %735 = vmatpush1.msra.mxu0 %v60
    %736 = vmatprep.subr.mxu0 0.0
    %737 = vmatpush1.msra.mxu0 %v61
    %738 = vmatprep.subr.mxu0 0.0
    %739 = vmatpush1.msra.mxu0 %v62
    %740 = vmatprep.subr.mxu0 0.0
    %741 = vmatpush1.msra.mxu0 %v63
    %742 = vmatprep.subr.mxu0 0.0
    %743 = vmatpush1.msra.mxu0 %v64
    %744 = vmatprep.subr.mxu0 0.0
    %745 = vmatpush1.msra.mxu0 %v65
    %746 = vmatprep.subr.mxu0 0.0
    %747 = vmatpush1.msra.mxu0 %v66
    %748 = vmatprep.subr.mxu0 0.0
    %749 = vmatpush1.msra.mxu0 %v67
    %750 = vmatprep.subr.mxu0 0.0
    %751 = vmatpush1.msra.mxu0 0.0
    %752 = vmatprep.subr.mxu0 0.0
    %753 = vmatpush1.msra.mxu0 0.0
    %754 = vmatprep.subr.mxu0 0.0
    %755 = vmatpush1.msra.mxu0 0.0
    %756 = vmatprep.subr.mxu0 0.0
    %757 = vmatpush1.msra.mxu0 0.0
    %758 = vmatprep.subr.mxu0 0.0
    %759 = vmatpush1.msra.mxu0 0.0
    %760 = vmatprep.subr.mxu0 0.0
    %761 = vmatpush1.msra.mxu0 0.0
    %762 = vmatprep.subr.mxu0 0.0
    %763 = vmatpush1.msra.mxu0 0.0
    %764 = vmatprep.subr.mxu0 0.0
    %765 = vmatpush1.msra.mxu0 0.0
    %766 = vmatprep.subr.mxu0 0.0
    %767 = vmatpush1.msra.mxu0 0.0
    %768 = vmatprep.subr.mxu0 0.0
    %769 = vmatpush1.msra.mxu0 0.0
    %770 = vmatprep.subr.mxu0 0.0
    %771 = vmatpush1.msra.mxu0 0.0
    %772 = vmatprep.subr.mxu0 0.0
    %773 = vmatpush1.msra.mxu0 0.0
    %774 = vmatprep.subr.mxu0 0.0
    %775 = vmatpush1.msra.mxu0 0.0
    %776 = vmatprep.subr.mxu0 0.0
    %777 = vmatpush1.msra.mxu0 0.0
    %778 = vmatprep.subr.mxu0 0.0
    %779 = vmatpush1.msra.mxu0 0.0
    %780 = vmatprep.subr.mxu0 0.0
    %781 = vmatpush1.msra.mxu0 0.0
    %782 = vmatprep.mubr.f32.mxu0 0.0
    %783 = vmatmul.mubr.f32.gmra.mrb[0].mxu0 %v717
    %v784 = vpop.f32.mrb[0].mxu0
    %v785 = vadd.f32 0.0, %v784
    %v786 = vpop.f32.mrb[0].mxu0
    %787 = vdwg.mxu0
    %v788 = vadd.f32 %v170, %v785
    %v789 = vtanh.pop %v788
    %v790 = vxor.u32 %v788, 2147483648
    %v791 = vmul.f32 %v790, 1.442695
    %v792 = vpow.pop %v791
    %v793 = vadd.f32 %v792, 1.0
    %v794 = vrcp.pop %v793
    %v795 = vmul.f32 1.0, %v794
    %v796 = vsel %vm27, %v789, %v795
    %797 = vrot.lane.b32.xlu0 %v796, 64
    %v798 = vpop.permute.xlu0 %797
    %799 = vrot.lane.b32.xlu0 %v796, 96
    %v800 = vpop.permute.xlu0 %799
    %801 = vrot.lane.b32.xlu0 %v796, 32
    %v802 = vpop.permute.xlu0 %801
    %v803 = vmul.f32 %v798, %v715
    %v804 = vmul.f32 %v800, %v802
    %v805 = vadd.f32 %v803, %v804
    %v806 = vtanh.pop %v805
    %v807 = vmul.f32 %v796, %v806
    %808 = vmatprep.subr.mxu0 0.0
    %809 = vmatpush1.msra.mxu0 %v52
    %810 = vmatprep.subr.mxu0 0.0
    %811 = vmatpush1.msra.mxu0 %v53
    %812 = vmatprep.subr.mxu0 0.0
    %813 = vmatpush1.msra.mxu0 %v54
    %814 = vmatprep.subr.mxu0 0.0
    %815 = vmatpush1.msra.mxu0 %v55
    %816 = vmatprep.subr.mxu0 0.0
    %817 = vmatpush1.msra.mxu0 %v56
    %818 = vmatprep.subr.mxu0 0.0
    %819 = vmatpush1.msra.mxu0 %v57
    %820 = vmatprep.subr.mxu0 0.0
    %821 = vmatpush1.msra.mxu0 %v58
    %822 = vmatprep.subr.mxu0 0.0
    %823 = vmatpush1.msra.mxu0 %v59
    %824 = vmatprep.subr.mxu0 0.0
    %825 = vmatpush1.msra.mxu0 %v60
    %826 = vmatprep.subr.mxu0 0.0
    %827 = vmatpush1.msra.mxu0 %v61
    %828 = vmatprep.subr.mxu0 0.0
    %829 = vmatpush1.msra.mxu0 %v62
    %830 = vmatprep.subr.mxu0 0.0
    %831 = vmatpush1.msra.mxu0 %v63
    %832 = vmatprep.subr.mxu0 0.0
    %833 = vmatpush1.msra.mxu0 %v64
    %834 = vmatprep.subr.mxu0 0.0
    %835 = vmatpush1.msra.mxu0 %v65
    %836 = vmatprep.subr.mxu0 0.0
    %837 = vmatpush1.msra.mxu0 %v66
    %838 = vmatprep.subr.mxu0 0.0
    %839 = vmatpush1.msra.mxu0 %v67
    %840 = vmatprep.subr.mxu0 0.0
    %841 = vmatpush1.msra.mxu0 0.0
    %842 = vmatprep.subr.mxu0 0.0
    %843 = vmatpush1.msra.mxu0 0.0
    %844 = vmatprep.subr.mxu0 0.0
    %845 = vmatpush1.msra.mxu0 0.0
    %846 = vmatprep.subr.mxu0 0.0
    %847 = vmatpush1.msra.mxu0 0.0
    %848 = vmatprep.subr.mxu0 0.0
    %849 = vmatpush1.msra.mxu0 0.0
    %850 = vmatprep.subr.mxu0 0.0
    %851 = vmatpush1.msra.mxu0 0.0
    %852 = vmatprep.subr.mxu0 0.0
    %853 = vmatpush1.msra.mxu0 0.0
    %854 = vmatprep.subr.mxu0 0.0
    %855 = vmatpush1.msra.mxu0 0.0
    %856 = vmatprep.subr.mxu0 0.0
    %857 = vmatpush1.msra.mxu0 0.0
    %858 = vmatprep.subr.mxu0 0.0
    %859 = vmatpush1.msra.mxu0 0.0
    %860 = vmatprep.subr.mxu0 0.0
    %861 = vmatpush1.msra.mxu0 0.0
    %862 = vmatprep.subr.mxu0 0.0
    %863 = vmatpush1.msra.mxu0 0.0
    %864 = vmatprep.subr.mxu0 0.0
    %865 = vmatpush1.msra.mxu0 0.0
    %866 = vmatprep.subr.mxu0 0.0
    %867 = vmatpush1.msra.mxu0 0.0
    %868 = vmatprep.subr.mxu0 0.0
    %869 = vmatpush1.msra.mxu0 0.0
    %870 = vmatprep.subr.mxu0 0.0
    %871 = vmatpush1.msra.mxu0 0.0
    %872 = vmatprep.mubr.f32.mxu0 0.0
    %873 = vmatmul.mubr.f32.gmra.mrb[0].mxu0 %v807
    %v874 = vpop.f32.mrb[0].mxu0
    %v875 = vadd.f32 0.0, %v874
    %v876 = vpop.f32.mrb[0].mxu0
    %877 = vdwg.mxu0
    %v878 = vadd.f32 %v175, %v875
    %v879 = vtanh.pop %v878
    %v880 = vxor.u32 %v878, 2147483648
    %v881 = vmul.f32 %v880, 1.442695
    %v882 = vpow.pop %v881
    %v883 = vadd.f32 %v882, 1.0
    %v884 = vrcp.pop %v883
    %v885 = vmul.f32 1.0, %v884
    %v886 = vsel %vm27, %v879, %v885
    %887 = vrot.lane.b32.xlu0 %v886, 64
    %v888 = vpop.permute.xlu0 %887
    %889 = vrot.lane.b32.xlu0 %v886, 96
    %v890 = vpop.permute.xlu0 %889
    %891 = vrot.lane.b32.xlu0 %v886, 32
    %v892 = vpop.permute.xlu0 %891
    %v893 = vmul.f32 %v888, %v805
    %v894 = vmul.f32 %v890, %v892
    %v895 = vadd.f32 %v893, %v894
    %v896 = vtanh.pop %v895
    %v897 = vmul.f32 %v886, %v896
    %v898 = vld [vmem:[#allocation2 + $0x108] sm:$0xff]
    %v899 = vld [vmem:[#allocation2 + $0x110] sm:$0xff]
    %v900 = vld [vmem:[#allocation2 + $0x118] sm:$0xff]
    %v901 = vld [vmem:[#allocation2 + $0x120] sm:$0xff]
    %v902 = vld [vmem:[#allocation2 + $0x128] sm:$0xff]
    %v903 = vld [vmem:[#allocation2 + $0x130] sm:$0xff]
    %v904 = vld [vmem:[#allocation2 + $0x138] sm:$0xff]
    %v905 = vld [vmem:[#allocation2 + $0x140] sm:$0xff]
    %v906 = vld [vmem:[#allocation2 + $0x148] sm:$0xff]
    %v907 = vld [vmem:[#allocation2 + $0x150] sm:$0xff]
    %v908 = vld [vmem:[#allocation2 + $0x158] sm:$0xff]
    %v909 = vld [vmem:[#allocation2 + $0x160] sm:$0xff]
    %v910 = vld [vmem:[#allocation2 + $0x168] sm:$0xff]
    %v911 = vld [vmem:[#allocation2 + $0x170] sm:$0xff]
    %v912 = vld [vmem:[#allocation2 + $0x178] sm:$0xff]
    %v913 = vld [vmem:[#allocation2 + $0x180] sm:$0xff]
    %v914 = vld [vmem:[#allocation2 + $0x188] sm:$0xff]
    %v915 = vld [vmem:[#allocation2 + $0x190] sm:$0xff]
    %v916 = vld [vmem:[#allocation2 + $0x198] sm:$0xff]
    %v917 = vld [vmem:[#allocation2 + $0x1a0] sm:$0xff]
    %v918 = vld [vmem:[#allocation2 + $0x1a8] sm:$0xff]
    %v919 = vld [vmem:[#allocation2 + $0x1b0] sm:$0xff]
    %v920 = vld [vmem:[#allocation2 + $0x1b8] sm:$0xff]
    %v921 = vld [vmem:[#allocation2 + $0x1c0] sm:$0xff]
    %v922 = vld [vmem:[#allocation2 + $0x1c8] sm:$0xff]
    %v923 = vld [vmem:[#allocation2 + $0x1d0] sm:$0xff]
    %v924 = vld [vmem:[#allocation2 + $0x1d8] sm:$0xff]
    %v925 = vld [vmem:[#allocation2 + $0x1e0] sm:$0xff]
    %v926 = vld [vmem:[#allocation2 + $0x1e8] sm:$0xff]
    %v927 = vld [vmem:[#allocation2 + $0x1f0] sm:$0xff]
    %v928 = vld [vmem:[#allocation2 + $0x1f8] sm:$0xff]
    %v929 = vld [vmem:[#allocation2 + $0x200] sm:$0xff]
    %v930 = vld [vmem:[#allocation2 + $0x208] sm:$0x1]
    %v931 = vlaneseq
    %v932 = vshrl.u32 %v931, 7
    %v933 = vsub.s32 0, %v932
    %v934 = vrot.slane %v930, %v933
    %935 = vmatprep.subr.mxu0 0.0
    %936 = vmatpush1.msra.mxu0 %v898
    %937 = vmatprep.subr.mxu0 0.0
    %938 = vmatpush1.msra.mxu0 %v899
    %939 = vmatprep.subr.mxu0 0.0
    %940 = vmatpush1.msra.mxu0 %v900
    %941 = vmatprep.subr.mxu0 0.0
    %942 = vmatpush1.msra.mxu0 %v901
    %943 = vmatprep.subr.mxu0 0.0
    %944 = vmatpush1.msra.mxu0 %v902
    %945 = vmatprep.subr.mxu0 0.0
    %946 = vmatpush1.msra.mxu0 %v903
    %947 = vmatprep.subr.mxu0 0.0
    %948 = vmatpush1.msra.mxu0 %v904
    %949 = vmatprep.subr.mxu0 0.0
    %950 = vmatpush1.msra.mxu0 %v905
    %951 = vmatprep.subr.mxu0 0.0
    %952 = vmatpush1.msra.mxu0 %v906
    %953 = vmatprep.subr.mxu0 0.0
    %954 = vmatpush1.msra.mxu0 %v907
    %955 = vmatprep.subr.mxu0 0.0
    %956 = vmatpush1.msra.mxu0 %v908
    %957 = vmatprep.subr.mxu0 0.0
    %958 = vmatpush1.msra.mxu0 %v909
    %959 = vmatprep.subr.mxu0 0.0
    %960 = vmatpush1.msra.mxu0 %v910
    %961 = vmatprep.subr.mxu0 0.0
    %962 = vmatpush1.msra.mxu0 %v911
    %963 = vmatprep.subr.mxu0 0.0
    %964 = vmatpush1.msra.mxu0 %v912
    %965 = vmatprep.subr.mxu0 0.0
    %966 = vmatpush1.msra.mxu0 %v913
    %967 = vmatprep.subr.mxu0 0.0
    %968 = vmatpush1.msra.mxu0 0.0
    %969 = vmatprep.subr.mxu0 0.0
    %970 = vmatpush1.msra.mxu0 0.0
    %971 = vmatprep.subr.mxu0 0.0
    %972 = vmatpush1.msra.mxu0 0.0
    %973 = vmatprep.subr.mxu0 0.0
    %974 = vmatpush1.msra.mxu0 0.0
    %975 = vmatprep.subr.mxu0 0.0
    %976 = vmatpush1.msra.mxu0 0.0
    %977 = vmatprep.subr.mxu0 0.0
    %978 = vmatpush1.msra.mxu0 0.0
    %979 = vmatprep.subr.mxu0 0.0
    %980 = vmatpush1.msra.mxu0 0.0
    %981 = vmatprep.subr.mxu0 0.0
    %982 = vmatpush1.msra.mxu0 0.0
    %983 = vmatprep.subr.mxu0 0.0
    %984 = vmatpush1.msra.mxu0 0.0
    %985 = vmatprep.subr.mxu0 0.0
    %986 = vmatpush1.msra.mxu0 0.0
    %987 = vmatprep.subr.mxu0 0.0
    %988 = vmatpush1.msra.mxu0 0.0
    %989 = vmatprep.subr.mxu0 0.0
    %990 = vmatpush1.msra.mxu0 0.0
    %991 = vmatprep.subr.mxu0 0.0
    %992 = vmatpush1.msra.mxu0 0.0
    %993 = vmatprep.subr.mxu0 0.0
    %994 = vmatpush1.msra.mxu0 0.0
    %995 = vmatprep.subr.mxu0 0.0
    %996 = vmatpush1.msra.mxu0 0.0
    %997 = vmatprep.subr.mxu0 0.0
    %998 = vmatpush1.msra.mxu0 0.0
    %999 = vmatprep.mubr.f32.mxu0 0.0
    %1000 = vmatmul.mubr.f32.gmra.mrb[0].mxu0 %v267
    %v1001 = vpop.f32.mrb[0].mxu0
    %v1002 = vadd.f32 %v934, %v1001
    %v1003 = vpop.f32.mrb[0].mxu0
    %1004 = vmatprep.mubr.f32.mxu0 0.0
    %1005 = vmatmul.mubr.f32.gmra.mrb[0].mxu0 %v357
    %v1006 = vpop.f32.mrb[0].mxu0
    %v1007 = vadd.f32 %v934, %v1006
    %v1008 = vpop.f32.mrb[0].mxu0
    %1009 = vmatprep.mubr.f32.mxu0 0.0
    %1010 = vmatmul.mubr.f32.gmra.mrb[0].mxu0 %v447
    %v1011 = vpop.f32.mrb[0].mxu0
    %v1012 = vadd.f32 %v934, %v1011
    %v1013 = vpop.f32.mrb[0].mxu0
    %1014 = vmatprep.mubr.f32.mxu0 0.0
    %1015 = vmatmul.mubr.f32.gmra.mrb[0].mxu0 %v537
    %v1016 = vpop.f32.mrb[0].mxu0
    %v1017 = vadd.f32 %v934, %v1016
    %v1018 = vpop.f32.mrb[0].mxu0
    %1019 = vmatprep.mubr.f32.mxu0 0.0
    %1020 = vmatmul.mubr.f32.gmra.mrb[0].mxu0 %v627
    %v1021 = vpop.f32.mrb[0].mxu0
    %v1022 = vadd.f32 %v934, %v1021
    %v1023 = vpop.f32.mrb[0].mxu0
    %1024 = vmatprep.mubr.f32.mxu0 0.0
    %1025 = vmatmul.mubr.f32.gmra.mrb[0].mxu0 %v717
    %v1026 = vpop.f32.mrb[0].mxu0
    %v1027 = vadd.f32 %v934, %v1026
    %v1028 = vpop.f32.mrb[0].mxu0
    %1029 = vmatprep.mubr.f32.mxu0 0.0
    %1030 = vmatmul.mubr.f32.gmra.mrb[0].mxu0 %v807
    %v1031 = vpop.f32.mrb[0].mxu0
    %v1032 = vadd.f32 %v934, %v1031
    %v1033 = vpop.f32.mrb[0].mxu0
    %1034 = vmatprep.mubr.f32.mxu0 0.0
    %1035 = vmatmul.mubr.f32.gmra.mrb[0].mxu0 %v897
    %v1036 = vpop.f32.mrb[0].mxu0
    %v1037 = vadd.f32 %v934, %v1036
    %v1038 = vpop.f32.mrb[0].mxu0
    %1039 = vdwg.mxu0
    %1040 = vmatprep.subr.mxu0 0.0
    %1041 = vmatpush1.msra.mxu0 %v914
    %1042 = vmatprep.subr.mxu0 0.0
    %1043 = vmatpush1.msra.mxu0 %v915
    %1044 = vmatprep.subr.mxu0 0.0
    %1045 = vmatpush1.msra.mxu0 %v916
    %1046 = vmatprep.subr.mxu0 0.0
    %1047 = vmatpush1.msra.mxu0 %v917
    %1048 = vmatprep.subr.mxu0 0.0
    %1049 = vmatpush1.msra.mxu0 %v918
    %1050 = vmatprep.subr.mxu0 0.0
    %1051 = vmatpush1.msra.mxu0 %v919
    %1052 = vmatprep.subr.mxu0 0.0
    %1053 = vmatpush1.msra.mxu0 %v920
    %1054 = vmatprep.subr.mxu0 0.0
    %1055 = vmatpush1.msra.mxu0 %v921
    %1056 = vmatprep.subr.mxu0 0.0
    %1057 = vmatpush1.msra.mxu0 %v922
    %1058 = vmatprep.subr.mxu0 0.0
    %1059 = vmatpush1.msra.mxu0 %v923
    %1060 = vmatprep.subr.mxu0 0.0
    %1061 = vmatpush1.msra.mxu0 %v924
    %1062 = vmatprep.subr.mxu0 0.0
    %1063 = vmatpush1.msra.mxu0 %v925
    %1064 = vmatprep.subr.mxu0 0.0
    %1065 = vmatpush1.msra.mxu0 %v926
    %1066 = vmatprep.subr.mxu0 0.0
    %1067 = vmatpush1.msra.mxu0 %v927
    %1068 = vmatprep.subr.mxu0 0.0
    %1069 = vmatpush1.msra.mxu0 %v928
    %1070 = vmatprep.subr.mxu0 0.0
    %1071 = vmatpush1.msra.mxu0 %v929
    %1072 = vmatprep.subr.mxu0 0.0
    %1073 = vmatpush1.msra.mxu0 0.0
    %1074 = vmatprep.subr.mxu0 0.0
    %1075 = vmatpush1.msra.mxu0 0.0
    %1076 = vmatprep.subr.mxu0 0.0
    %1077 = vmatpush1.msra.mxu0 0.0
    %1078 = vmatprep.subr.mxu0 0.0
    %1079 = vmatpush1.msra.mxu0 0.0
    %1080 = vmatprep.subr.mxu0 0.0
    %1081 = vmatpush1.msra.mxu0 0.0
    %1082 = vmatprep.subr.mxu0 0.0
    %1083 = vmatpush1.msra.mxu0 0.0
    %1084 = vmatprep.subr.mxu0 0.0
    %1085 = vmatpush1.msra.mxu0 0.0
    %1086 = vmatprep.subr.mxu0 0.0
    %1087 = vmatpush1.msra.mxu0 0.0
    %1088 = vmatprep.subr.mxu0 0.0
    %1089 = vmatpush1.msra.mxu0 0.0
    %1090 = vmatprep.subr.mxu0 0.0
    %1091 = vmatpush1.msra.mxu0 0.0
    %1092 = vmatprep.subr.mxu0 0.0
    %1093 = vmatpush1.msra.mxu0 0.0
    %1094 = vmatprep.subr.mxu0 0.0
    %1095 = vmatpush1.msra.mxu0 0.0
    %1096 = vmatprep.subr.mxu0 0.0
    %1097 = vmatpush1.msra.mxu0 0.0
    %1098 = vmatprep.subr.mxu0 0.0
    %1099 = vmatpush1.msra.mxu0 0.0
    %1100 = vmatprep.subr.mxu0 0.0
    %1101 = vmatpush1.msra.mxu0 0.0
    %1102 = vmatprep.subr.mxu0 0.0
    %1103 = vmatpush1.msra.mxu0 0.0
    %1104 = vmatprep.mubr.f32.mxu0 0.0
    %1105 = vmatmul.mubr.f32.gmra.mrb[0].mxu0 0.0
    %v1106 = vpop.f32.mrb[0].mxu0
    %v1107 = vadd.f32 0.0, %v1106
    %v1108 = vpop.f32.mrb[0].mxu0
    %1109 = vdwg.mxu0
    %v1110 = vadd.f32 %v1002, %v1107
    %v1111 = vtanh.pop %v1110
    %v1112 = vxor.u32 %v1110, 2147483648
    %v1113 = vmul.f32 %v1112, 1.442695
    %v1114 = vpow.pop %v1113
    %v1115 = vadd.f32 %v1114, 1.0
    %v1116 = vrcp.pop %v1115
    %v1117 = vmul.f32 1.0, %v1116
    %v1118 = vsel %vm27, %v1111, %v1117
    %1119 = vrot.lane.b32.xlu0 %v1118, 64
    %v1120 = vpop.permute.xlu0 %1119
    %1121 = vrot.lane.b32.xlu0 %v1118, 96
    %v1122 = vpop.permute.xlu0 %1121
    %1123 = vrot.lane.b32.xlu0 %v1118, 32
    %v1124 = vpop.permute.xlu0 %1123
    %v1125 = vmul.f32 %v1120, 0.0
    %v1126 = vmul.f32 %v1122, %v1124
    %v1127 = vadd.f32 %v1125, %v1126
    %v1128 = vtanh.pop %v1127
    %v1129 = vmul.f32 %v1118, %v1128
    %1130 = vmatprep.subr.mxu0 0.0
    %1131 = vmatpush1.msra.mxu0 %v914
    %1132 = vmatprep.subr.mxu0 0.0
    %1133 = vmatpush1.msra.mxu0 %v915
    %1134 = vmatprep.subr.mxu0 0.0
    %1135 = vmatpush1.msra.mxu0 %v916
    %1136 = vmatprep.subr.mxu0 0.0
    %1137 = vmatpush1.msra.mxu0 %v917
    %1138 = vmatprep.subr.mxu0 0.0
    %1139 = vmatpush1.msra.mxu0 %v918
    %1140 = vmatprep.subr.mxu0 0.0
    %1141 = vmatpush1.msra.mxu0 %v919
    %1142 = vmatprep.subr.mxu0 0.0
    %1143 = vmatpush1.msra.mxu0 %v920
    %1144 = vmatprep.subr.mxu0 0.0
    %1145 = vmatpush1.msra.mxu0 %v921
    %1146 = vmatprep.subr.mxu0 0.0
    %1147 = vmatpush1.msra.mxu0 %v922
    %1148 = vmatprep.subr.mxu0 0.0
    %1149 = vmatpush1.msra.mxu0 %v923
    %1150 = vmatprep.subr.mxu0 0.0
    %1151 = vmatpush1.msra.mxu0 %v924
    %1152 = vmatprep.subr.mxu0 0.0
    %1153 = vmatpush1.msra.mxu0 %v925
    %1154 = vmatprep.subr.mxu0 0.0
    %1155 = vmatpush1.msra.mxu0 %v926
    %1156 = vmatprep.subr.mxu0 0.0
    %1157 = vmatpush1.msra.mxu0 %v927
    %1158 = vmatprep.subr.mxu0 0.0
    %1159 = vmatpush1.msra.mxu0 %v928
    %1160 = vmatprep.subr.mxu0 0.0
    %1161 = vmatpush1.msra.mxu0 %v929
    %1162 = vmatprep.subr.mxu0 0.0
    %1163 = vmatpush1.msra.mxu0 0.0
    %1164 = vmatprep.subr.mxu0 0.0
    %1165 = vmatpush1.msra.mxu0 0.0
    %1166 = vmatprep.subr.mxu0 0.0
    %1167 = vmatpush1.msra.mxu0 0.0
    %1168 = vmatprep.subr.mxu0 0.0
    %1169 = vmatpush1.msra.mxu0 0.0
    %1170 = vmatprep.subr.mxu0 0.0
    %1171 = vmatpush1.msra.mxu0 0.0
    %1172 = vmatprep.subr.mxu0 0.0
    %1173 = vmatpush1.msra.mxu0 0.0
    %1174 = vmatprep.subr.mxu0 0.0
    %1175 = vmatpush1.msra.mxu0 0.0
    %1176 = vmatprep.subr.mxu0 0.0
    %1177 = vmatpush1.msra.mxu0 0.0
    %1178 = vmatprep.subr.mxu0 0.0
    %1179 = vmatpush1.msra.mxu0 0.0
    %1180 = vmatprep.subr.mxu0 0.0
    %1181 = vmatpush1.msra.mxu0 0.0
    %1182 = vmatprep.subr.mxu0 0.0
    %1183 = vmatpush1.msra.mxu0 0.0
    %1184 = vmatprep.subr.mxu0 0.0
    %1185 = vmatpush1.msra.mxu0 0.0
    %1186 = vmatprep.subr.mxu0 0.0
    %1187 = vmatpush1.msra.mxu0 0.0
    %1188 = vmatprep.subr.mxu0 0.0
    %1189 = vmatpush1.msra.mxu0 0.0
    %1190 = vmatprep.subr.mxu0 0.0
    %1191 = vmatpush1.msra.mxu0 0.0
    %1192 = vmatprep.subr.mxu0 0.0
    %1193 = vmatpush1.msra.mxu0 0.0
    %1194 = vmatprep.mubr.f32.mxu0 0.0
    %1195 = vmatmul.mubr.f32.gmra.mrb[0].mxu0 %v1129
    %v1196 = vpop.f32.mrb[0].mxu0
    %v1197 = vadd.f32 0.0, %v1196
    %v1198 = vpop.f32.mrb[0].mxu0
    %1199 = vdwg.mxu0
    %v1200 = vadd.f32 %v1007, %v1197
    %v1201 = vtanh.pop %v1200
    %v1202 = vxor.u32 %v1200, 2147483648
    %v1203 = vmul.f32 %v1202, 1.442695
    %v1204 = vpow.pop %v1203
    %v1205 = vadd.f32 %v1204, 1.0
    %v1206 = vrcp.pop %v1205
    %v1207 = vmul.f32 1.0, %v1206
    %v1208 = vsel %vm27, %v1201, %v1207
    %1209 = vrot.lane.b32.xlu0 %v1208, 64
    %v1210 = vpop.permute.xlu0 %1209
    %1211 = vrot.lane.b32.xlu0 %v1208, 96
    %v1212 = vpop.permute.xlu0 %1211
    %1213 = vrot.lane.b32.xlu0 %v1208, 32
    %v1214 = vpop.permute.xlu0 %1213
    %v1215 = vmul.f32 %v1210, %v1127
    %v1216 = vmul.f32 %v1212, %v1214
    %v1217 = vadd.f32 %v1215, %v1216
    %v1218 = vtanh.pop %v1217
    %v1219 = vmul.f32 %v1208, %v1218
    %1220 = vmatprep.subr.mxu0 0.0
    %1221 = vmatpush1.msra.mxu0 %v914
    %1222 = vmatprep.subr.mxu0 0.0
    %1223 = vmatpush1.msra.mxu0 %v915
    %1224 = vmatprep.subr.mxu0 0.0
    %1225 = vmatpush1.msra.mxu0 %v916
    %1226 = vmatprep.subr.mxu0 0.0
    %1227 = vmatpush1.msra.mxu0 %v917
    %1228 = vmatprep.subr.mxu0 0.0
    %1229 = vmatpush1.msra.mxu0 %v918
    %1230 = vmatprep.subr.mxu0 0.0
    %1231 = vmatpush1.msra.mxu0 %v919
    %1232 = vmatprep.subr.mxu0 0.0
    %1233 = vmatpush1.msra.mxu0 %v920
    %1234 = vmatprep.subr.mxu0 0.0
    %1235 = vmatpush1.msra.mxu0 %v921
    %1236 = vmatprep.subr.mxu0 0.0
    %1237 = vmatpush1.msra.mxu0 %v922
    %1238 = vmatprep.subr.mxu0 0.0
    %1239 = vmatpush1.msra.mxu0 %v923
    %1240 = vmatprep.subr.mxu0 0.0
    %1241 = vmatpush1.msra.mxu0 %v924
    %1242 = vmatprep.subr.mxu0 0.0
    %1243 = vmatpush1.msra.mxu0 %v925
    %1244 = vmatprep.subr.mxu0 0.0
    %1245 = vmatpush1.msra.mxu0 %v926
    %1246 = vmatprep.subr.mxu0 0.0
    %1247 = vmatpush1.msra.mxu0 %v927
    %1248 = vmatprep.subr.mxu0 0.0
    %1249 = vmatpush1.msra.mxu0 %v928
    %1250 = vmatprep.subr.mxu0 0.0
    %1251 = vmatpush1.msra.mxu0 %v929
    %1252 = vmatprep.subr.mxu0 0.0
    %1253 = vmatpush1.msra.mxu0 0.0
    %1254 = vmatprep.subr.mxu0 0.0
    %1255 = vmatpush1.msra.mxu0 0.0
    %1256 = vmatprep.subr.mxu0 0.0
    %1257 = vmatpush1.msra.mxu0 0.0
    %1258 = vmatprep.subr.mxu0 0.0
    %1259 = vmatpush1.msra.mxu0 0.0
    %1260 = vmatprep.subr.mxu0 0.0
    %1261 = vmatpush1.msra.mxu0 0.0
    %1262 = vmatprep.subr.mxu0 0.0
    %1263 = vmatpush1.msra.mxu0 0.0
    %1264 = vmatprep.subr.mxu0 0.0
    %1265 = vmatpush1.msra.mxu0 0.0
    %1266 = vmatprep.subr.mxu0 0.0
    %1267 = vmatpush1.msra.mxu0 0.0
    %1268 = vmatprep.subr.mxu0 0.0
    %1269 = vmatpush1.msra.mxu0 0.0
    %1270 = vmatprep.subr.mxu0 0.0
    %1271 = vmatpush1.msra.mxu0 0.0
    %1272 = vmatprep.subr.mxu0 0.0
    %1273 = vmatpush1.msra.mxu0 0.0
    %1274 = vmatprep.subr.mxu0 0.0
    %1275 = vmatpush1.msra.mxu0 0.0
    %1276 = vmatprep.subr.mxu0 0.0
    %1277 = vmatpush1.msra.mxu0 0.0
    %1278 = vmatprep.subr.mxu0 0.0
    %1279 = vmatpush1.msra.mxu0 0.0
    %1280 = vmatprep.subr.mxu0 0.0
    %1281 = vmatpush1.msra.mxu0 0.0
    %1282 = vmatprep.subr.mxu0 0.0
    %1283 = vmatpush1.msra.mxu0 0.0
    %1284 = vmatprep.mubr.f32.mxu0 0.0
    %1285 = vmatmul.mubr.f32.gmra.mrb[0].mxu0 %v1219
    %v1286 = vpop.f32.mrb[0].mxu0
    %v1287 = vadd.f32 0.0, %v1286
    %v1288 = vpop.f32.mrb[0].mxu0
    %1289 = vdwg.mxu0
    %v1290 = vadd.f32 %v1012, %v1287
    %v1291 = vtanh.pop %v1290
    %v1292 = vxor.u32 %v1290, 2147483648
    %v1293 = vmul.f32 %v1292, 1.442695
    %v1294 = vpow.pop %v1293
    %v1295 = vadd.f32 %v1294, 1.0
    %v1296 = vrcp.pop %v1295
    %v1297 = vmul.f32 1.0, %v1296
    %v1298 = vsel %vm27, %v1291, %v1297
    %1299 = vrot.lane.b32.xlu0 %v1298, 64
    %v1300 = vpop.permute.xlu0 %1299
    %1301 = vrot.lane.b32.xlu0 %v1298, 96
    %v1302 = vpop.permute.xlu0 %1301
    %1303 = vrot.lane.b32.xlu0 %v1298, 32
    %v1304 = vpop.permute.xlu0 %1303
    %v1305 = vmul.f32 %v1300, %v1217
    %v1306 = vmul.f32 %v1302, %v1304
    %v1307 = vadd.f32 %v1305, %v1306
    %v1308 = vtanh.pop %v1307
    %v1309 = vmul.f32 %v1298, %v1308
    %1310 = vmatprep.subr.mxu0 0.0
    %1311 = vmatpush1.msra.mxu0 %v914
    %1312 = vmatprep.subr.mxu0 0.0
    %1313 = vmatpush1.msra.mxu0 %v915
    %1314 = vmatprep.subr.mxu0 0.0
    %1315 = vmatpush1.msra.mxu0 %v916
    %1316 = vmatprep.subr.mxu0 0.0
    %1317 = vmatpush1.msra.mxu0 %v917
    %1318 = vmatprep.subr.mxu0 0.0
    %1319 = vmatpush1.msra.mxu0 %v918
    %1320 = vmatprep.subr.mxu0 0.0
    %1321 = vmatpush1.msra.mxu0 %v919
    %1322 = vmatprep.subr.mxu0 0.0
    %1323 = vmatpush1.msra.mxu0 %v920
    %1324 = vmatprep.subr.mxu0 0.0
    %1325 = vmatpush1.msra.mxu0 %v921
    %1326 = vmatprep.subr.mxu0 0.0
    %1327 = vmatpush1.msra.mxu0 %v922
    %1328 = vmatprep.subr.mxu0 0.0
    %1329 = vmatpush1.msra.mxu0 %v923
    %1330 = vmatprep.subr.mxu0 0.0
    %1331 = vmatpush1.msra.mxu0 %v924
    %1332 = vmatprep.subr.mxu0 0.0
    %1333 = vmatpush1.msra.mxu0 %v925
    %1334 = vmatprep.subr.mxu0 0.0
    %1335 = vmatpush1.msra.mxu0 %v926
    %1336 = vmatprep.subr.mxu0 0.0
    %1337 = vmatpush1.msra.mxu0 %v927
    %1338 = vmatprep.subr.mxu0 0.0
    %1339 = vmatpush1.msra.mxu0 %v928
    %1340 = vmatprep.subr.mxu0 0.0
    %1341 = vmatpush1.msra.mxu0 %v929
    %1342 = vmatprep.subr.mxu0 0.0
    %1343 = vmatpush1.msra.mxu0 0.0
    %1344 = vmatprep.subr.mxu0 0.0
    %1345 = vmatpush1.msra.mxu0 0.0
    %1346 = vmatprep.subr.mxu0 0.0
    %1347 = vmatpush1.msra.mxu0 0.0
    %1348 = vmatprep.subr.mxu0 0.0
    %1349 = vmatpush1.msra.mxu0 0.0
    %1350 = vmatprep.subr.mxu0 0.0
    %1351 = vmatpush1.msra.mxu0 0.0
    %1352 = vmatprep.subr.mxu0 0.0
    %1353 = vmatpush1.msra.mxu0 0.0
    %1354 = vmatprep.subr.mxu0 0.0
    %1355 = vmatpush1.msra.mxu0 0.0
    %1356 = vmatprep.subr.mxu0 0.0
    %1357 = vmatpush1.msra.mxu0 0.0
    %1358 = vmatprep.subr.mxu0 0.0
    %1359 = vmatpush1.msra.mxu0 0.0
    %1360 = vmatprep.subr.mxu0 0.0
    %1361 = vmatpush1.msra.mxu0 0.0
    %1362 = vmatprep.subr.mxu0 0.0
    %1363 = vmatpush1.msra.mxu0 0.0
    %1364 = vmatprep.subr.mxu0 0.0
    %1365 = vmatpush1.msra.mxu0 0.0
    %1366 = vmatprep.subr.mxu0 0.0
    %1367 = vmatpush1.msra.mxu0 0.0
    %1368 = vmatprep.subr.mxu0 0.0
    %1369 = vmatpush1.msra.mxu0 0.0
    %1370 = vmatprep.subr.mxu0 0.0
    %1371 = vmatpush1.msra.mxu0 0.0
    %1372 = vmatprep.subr.mxu0 0.0
    %1373 = vmatpush1.msra.mxu0 0.0
    %1374 = vmatprep.mubr.f32.mxu0 0.0
    %1375 = vmatmul.mubr.f32.gmra.mrb[0].mxu0 %v1309
    %v1376 = vpop.f32.mrb[0].mxu0
    %v1377 = vadd.f32 0.0, %v1376
    %v1378 = vpop.f32.mrb[0].mxu0
    %1379 = vdwg.mxu0
    %v1380 = vadd.f32 %v1017, %v1377
    %v1381 = vtanh.pop %v1380
    %v1382 = vxor.u32 %v1380, 2147483648
    %v1383 = vmul.f32 %v1382, 1.442695
    %v1384 = vpow.pop %v1383
    %v1385 = vadd.f32 %v1384, 1.0
    %v1386 = vrcp.pop %v1385
    %v1387 = vmul.f32 1.0, %v1386
    %v1388 = vsel %vm27, %v1381, %v1387
    %1389 = vrot.lane.b32.xlu0 %v1388, 64
    %v1390 = vpop.permute.xlu0 %1389
    %1391 = vrot.lane.b32.xlu0 %v1388, 96
    %v1392 = vpop.permute.xlu0 %1391
    %1393 = vrot.lane.b32.xlu0 %v1388, 32
    %v1394 = vpop.permute.xlu0 %1393
    %v1395 = vmul.f32 %v1390, %v1307
    %v1396 = vmul.f32 %v1392, %v1394
    %v1397 = vadd.f32 %v1395, %v1396
    %v1398 = vtanh.pop %v1397
    %v1399 = vmul.f32 %v1388, %v1398
    %1400 = vmatprep.subr.mxu0 0.0
    %1401 = vmatpush1.msra.mxu0 %v914
    %1402 = vmatprep.subr.mxu0 0.0
    %1403 = vmatpush1.msra.mxu0 %v915
    %1404 = vmatprep.subr.mxu0 0.0
    %1405 = vmatpush1.msra.mxu0 %v916
    %1406 = vmatprep.subr.mxu0 0.0
    %1407 = vmatpush1.msra.mxu0 %v917
    %1408 = vmatprep.subr.mxu0 0.0
    %1409 = vmatpush1.msra.mxu0 %v918
    %1410 = vmatprep.subr.mxu0 0.0
    %1411 = vmatpush1.msra.mxu0 %v919
    %1412 = vmatprep.subr.mxu0 0.0
    %1413 = vmatpush1.msra.mxu0 %v920
    %1414 = vmatprep.subr.mxu0 0.0
    %1415 = vmatpush1.msra.mxu0 %v921
    %1416 = vmatprep.subr.mxu0 0.0
    %1417 = vmatpush1.msra.mxu0 %v922
    %1418 = vmatprep.subr.mxu0 0.0
    %1419 = vmatpush1.msra.mxu0 %v923
    %1420 = vmatprep.subr.mxu0 0.0
    %1421 = vmatpush1.msra.mxu0 %v924
    %1422 = vmatprep.subr.mxu0 0.0
    %1423 = vmatpush1.msra.mxu0 %v925
    %1424 = vmatprep.subr.mxu0 0.0
    %1425 = vmatpush1.msra.mxu0 %v926
    %1426 = vmatprep.subr.mxu0 0.0
    %1427 = vmatpush1.msra.mxu0 %v927
    %1428 = vmatprep.subr.mxu0 0.0
    %1429 = vmatpush1.msra.mxu0 %v928
    %1430 = vmatprep.subr.mxu0 0.0
    %1431 = vmatpush1.msra.mxu0 %v929
    %1432 = vmatprep.subr.mxu0 0.0
    %1433 = vmatpush1.msra.mxu0 0.0
    %1434 = vmatprep.subr.mxu0 0.0
    %1435 = vmatpush1.msra.mxu0 0.0
    %1436 = vmatprep.subr.mxu0 0.0
    %1437 = vmatpush1.msra.mxu0 0.0
    %1438 = vmatprep.subr.mxu0 0.0
    %1439 = vmatpush1.msra.mxu0 0.0
    %1440 = vmatprep.subr.mxu0 0.0
    %1441 = vmatpush1.msra.mxu0 0.0
    %1442 = vmatprep.subr.mxu0 0.0
    %1443 = vmatpush1.msra.mxu0 0.0
    %1444 = vmatprep.subr.mxu0 0.0
    %1445 = vmatpush1.msra.mxu0 0.0
    %1446 = vmatprep.subr.mxu0 0.0
    %1447 = vmatpush1.msra.mxu0 0.0
    %1448 = vmatprep.subr.mxu0 0.0
    %1449 = vmatpush1.msra.mxu0 0.0
    %1450 = vmatprep.subr.mxu0 0.0
    %1451 = vmatpush1.msra.mxu0 0.0
    %1452 = vmatprep.subr.mxu0 0.0
    %1453 = vmatpush1.msra.mxu0 0.0
    %1454 = vmatprep.subr.mxu0 0.0
    %1455 = vmatpush1.msra.mxu0 0.0
    %1456 = vmatprep.subr.mxu0 0.0
    %1457 = vmatpush1.msra.mxu0 0.0
    %1458 = vmatprep.subr.mxu0 0.0
    %1459 = vmatpush1.msra.mxu0 0.0
    %1460 = vmatprep.subr.mxu0 0.0
    %1461 = vmatpush1.msra.mxu0 0.0
    %1462 = vmatprep.subr.mxu0 0.0
    %1463 = vmatpush1.msra.mxu0 0.0
    %1464 = vmatprep.mubr.f32.mxu0 0.0
    %1465 = vmatmul.mubr.f32.gmra.mrb[0].mxu0 %v1399
    %v1466 = vpop.f32.mrb[0].mxu0
    %v1467 = vadd.f32 0.0, %v1466
    %v1468 = vpop.f32.mrb[0].mxu0
    %1469 = vdwg.mxu0
    %v1470 = vadd.f32 %v1022, %v1467
    %v1471 = vtanh.pop %v1470
    %v1472 = vxor.u32 %v1470, 2147483648
    %v1473 = vmul.f32 %v1472, 1.442695
    %v1474 = vpow.pop %v1473
    %v1475 = vadd.f32 %v1474, 1.0
    %v1476 = vrcp.pop %v1475
    %v1477 = vmul.f32 1.0, %v1476
    %v1478 = vsel %vm27, %v1471, %v1477
    %1479 = vrot.lane.b32.xlu0 %v1478, 64
    %v1480 = vpop.permute.xlu0 %1479
    %1481 = vrot.lane.b32.xlu0 %v1478, 96
    %v1482 = vpop.permute.xlu0 %1481
    %1483 = vrot.lane.b32.xlu0 %v1478, 32
    %v1484 = vpop.permute.xlu0 %1483
    %v1485 = vmul.f32 %v1480, %v1397
    %v1486 = vmul.f32 %v1482, %v1484
    %v1487 = vadd.f32 %v1485, %v1486
    %v1488 = vtanh.pop %v1487
    %v1489 = vmul.f32 %v1478, %v1488
    %1490 = vmatprep.subr.mxu0 0.0
    %1491 = vmatpush1.msra.mxu0 %v914
    %1492 = vmatprep.subr.mxu0 0.0
    %1493 = vmatpush1.msra.mxu0 %v915
    %1494 = vmatprep.subr.mxu0 0.0
    %1495 = vmatpush1.msra.mxu0 %v916
    %1496 = vmatprep.subr.mxu0 0.0
    %1497 = vmatpush1.msra.mxu0 %v917
    %1498 = vmatprep.subr.mxu0 0.0
    %1499 = vmatpush1.msra.mxu0 %v918
    %1500 = vmatprep.subr.mxu0 0.0
    %1501 = vmatpush1.msra.mxu0 %v919
    %1502 = vmatprep.subr.mxu0 0.0
    %1503 = vmatpush1.msra.mxu0 %v920
    %1504 = vmatprep.subr.mxu0 0.0
    %1505 = vmatpush1.msra.mxu0 %v921
    %1506 = vmatprep.subr.mxu0 0.0
    %1507 = vmatpush1.msra.mxu0 %v922
    %1508 = vmatprep.subr.mxu0 0.0
    %1509 = vmatpush1.msra.mxu0 %v923
    %1510 = vmatprep.subr.mxu0 0.0
    %1511 = vmatpush1.msra.mxu0 %v924
    %1512 = vmatprep.subr.mxu0 0.0
    %1513 = vmatpush1.msra.mxu0 %v925
    %1514 = vmatprep.subr.mxu0 0.0
    %1515 = vmatpush1.msra.mxu0 %v926
    %1516 = vmatprep.subr.mxu0 0.0
    %1517 = vmatpush1.msra.mxu0 %v927
    %1518 = vmatprep.subr.mxu0 0.0
    %1519 = vmatpush1.msra.mxu0 %v928
    %1520 = vmatprep.subr.mxu0 0.0
    %1521 = vmatpush1.msra.mxu0 %v929
    %1522 = vmatprep.subr.mxu0 0.0
    %1523 = vmatpush1.msra.mxu0 0.0
    %1524 = vmatprep.subr.mxu0 0.0
    %1525 = vmatpush1.msra.mxu0 0.0
    %1526 = vmatprep.subr.mxu0 0.0
    %1527 = vmatpush1.msra.mxu0 0.0
    %1528 = vmatprep.subr.mxu0 0.0
    %1529 = vmatpush1.msra.mxu0 0.0
    %1530 = vmatprep.subr.mxu0 0.0
    %1531 = vmatpush1.msra.mxu0 0.0
    %1532 = vmatprep.subr.mxu0 0.0
    %1533 = vmatpush1.msra.mxu0 0.0
    %1534 = vmatprep.subr.mxu0 0.0
    %1535 = vmatpush1.msra.mxu0 0.0
    %1536 = vmatprep.subr.mxu0 0.0
    %1537 = vmatpush1.msra.mxu0 0.0
    %1538 = vmatprep.subr.mxu0 0.0
    %1539 = vmatpush1.msra.mxu0 0.0
    %1540 = vmatprep.subr.mxu0 0.0
    %1541 = vmatpush1.msra.mxu0 0.0
    %1542 = vmatprep.subr.mxu0 0.0
    %1543 = vmatpush1.msra.mxu0 0.0
    %1544 = vmatprep.subr.mxu0 0.0
    %1545 = vmatpush1.msra.mxu0 0.0
    %1546 = vmatprep.subr.mxu0 0.0
    %1547 = vmatpush1.msra.mxu0 0.0
    %1548 = vmatprep.subr.mxu0 0.0
    %1549 = vmatpush1.msra.mxu0 0.0
    %1550 = vmatprep.subr.mxu0 0.0
    %1551 = vmatpush1.msra.mxu0 0.0
    %1552 = vmatprep.subr.mxu0 0.0
    %1553 = vmatpush1.msra.mxu0 0.0
    %1554 = vmatprep.mubr.f32.mxu0 0.0
    %1555 = vmatmul.mubr.f32.gmra.mrb[0].mxu0 %v1489
    %v1556 = vpop.f32.mrb[0].mxu0
    %v1557 = vadd.f32 0.0, %v1556
    %v1558 = vpop.f32.mrb[0].mxu0
    %1559 = vdwg.mxu0
    %v1560 = vadd.f32 %v1027, %v1557
    %v1561 = vtanh.pop %v1560
    %v1562 = vxor.u32 %v1560, 2147483648
    %v1563 = vmul.f32 %v1562, 1.442695
    %v1564 = vpow.pop %v1563
    %v1565 = vadd.f32 %v1564, 1.0
    %v1566 = vrcp.pop %v1565
    %v1567 = vmul.f32 1.0, %v1566
    %v1568 = vsel %vm27, %v1561, %v1567
    %1569 = vrot.lane.b32.xlu0 %v1568, 64
    %v1570 = vpop.permute.xlu0 %1569
    %1571 = vrot.lane.b32.xlu0 %v1568, 96
    %v1572 = vpop.permute.xlu0 %1571
    %1573 = vrot.lane.b32.xlu0 %v1568, 32
    %v1574 = vpop.permute.xlu0 %1573
    %v1575 = vmul.f32 %v1570, %v1487
    %v1576 = vmul.f32 %v1572, %v1574
    %v1577 = vadd.f32 %v1575, %v1576
    %v1578 = vtanh.pop %v1577
    %v1579 = vmul.f32 %v1568, %v1578
    %1580 = vmatprep.subr.mxu0 0.0
    %1581 = vmatpush1.msra.mxu0 %v914
    %1582 = vmatprep.subr.mxu0 0.0
    %1583 = vmatpush1.msra.mxu0 %v915
    %1584 = vmatprep.subr.mxu0 0.0
    %1585 = vmatpush1.msra.mxu0 %v916
    %1586 = vmatprep.subr.mxu0 0.0
    %1587 = vmatpush1.msra.mxu0 %v917
    %1588 = vmatprep.subr.mxu0 0.0
    %1589 = vmatpush1.msra.mxu0 %v918
    %1590 = vmatprep.subr.mxu0 0.0
    %1591 = vmatpush1.msra.mxu0 %v919
    %1592 = vmatprep.subr.mxu0 0.0
    %1593 = vmatpush1.msra.mxu0 %v920
    %1594 = vmatprep.subr.mxu0 0.0
    %1595 = vmatpush1.msra.mxu0 %v921
    %1596 = vmatprep.subr.mxu0 0.0
    %1597 = vmatpush1.msra.mxu0 %v922
    %1598 = vmatprep.subr.mxu0 0.0
    %1599 = vmatpush1.msra.mxu0 %v923
    %1600 = vmatprep.subr.mxu0 0.0
    %1601 = vmatpush1.msra.mxu0 %v924
    %1602 = vmatprep.subr.mxu0 0.0
    %1603 = vmatpush1.msra.mxu0 %v925
    %1604 = vmatprep.subr.mxu0 0.0
    %1605 = vmatpush1.msra.mxu0 %v926
    %1606 = vmatprep.subr.mxu0 0.0
    %1607 = vmatpush1.msra.mxu0 %v927
    %1608 = vmatprep.subr.mxu0 0.0
    %1609 = vmatpush1.msra.mxu0 %v928
    %1610 = vmatprep.subr.mxu0 0.0
    %1611 = vmatpush1.msra.mxu0 %v929
    %1612 = vmatprep.subr.mxu0 0.0
    %1613 = vmatpush1.msra.mxu0 0.0
    %1614 = vmatprep.subr.mxu0 0.0
    %1615 = vmatpush1.msra.mxu0 0.0
    %1616 = vmatprep.subr.mxu0 0.0
    %1617 = vmatpush1.msra.mxu0 0.0
    %1618 = vmatprep.subr.mxu0 0.0
    %1619 = vmatpush1.msra.mxu0 0.0
    %1620 = vmatprep.subr.mxu0 0.0
    %1621 = vmatpush1.msra.mxu0 0.0
    %1622 = vmatprep.subr.mxu0 0.0
    %1623 = vmatpush1.msra.mxu0 0.0
    %1624 = vmatprep.subr.mxu0 0.0
    %1625 = vmatpush1.msra.mxu0 0.0
    %1626 = vmatprep.subr.mxu0 0.0
    %1627 = vmatpush1.msra.mxu0 0.0
    %1628 = vmatprep.subr.mxu0 0.0
    %1629 = vmatpush1.msra.mxu0 0.0
    %1630 = vmatprep.subr.mxu0 0.0
    %1631 = vmatpush1.msra.mxu0 0.0
    %1632 = vmatprep.subr.mxu0 0.0
    %1633 = vmatpush1.msra.mxu0 0.0
    %1634 = vmatprep.subr.mxu0 0.0
    %1635 = vmatpush1.msra.mxu0 0.0
    %1636 = vmatprep.subr.mxu0 0.0
    %1637 = vmatpush1.msra.mxu0 0.0
    %1638 = vmatprep.subr.mxu0 0.0
    %1639 = vmatpush1.msra.mxu0 0.0
    %1640 = vmatprep.subr.mxu0 0.0
    %1641 = vmatpush1.msra.mxu0 0.0
    %1642 = vmatprep.subr.mxu0 0.0
    %1643 = vmatpush1.msra.mxu0 0.0
    %1644 = vmatprep.mubr.f32.mxu0 0.0
    %1645 = vmatmul.mubr.f32.gmra.mrb[0].mxu0 %v1579
    %v1646 = vpop.f32.mrb[0].mxu0
    %v1647 = vadd.f32 0.0, %v1646
    %v1648 = vpop.f32.mrb[0].mxu0
    %1649 = vdwg.mxu0
    %v1650 = vadd.f32 %v1032, %v1647
    %v1651 = vtanh.pop %v1650
    %v1652 = vxor.u32 %v1650, 2147483648
    %v1653 = vmul.f32 %v1652, 1.442695
    %v1654 = vpow.pop %v1653
    %v1655 = vadd.f32 %v1654, 1.0
    %v1656 = vrcp.pop %v1655
    %v1657 = vmul.f32 1.0, %v1656
    %v1658 = vsel %vm27, %v1651, %v1657
    %1659 = vrot.lane.b32.xlu0 %v1658, 64
    %v1660 = vpop.permute.xlu0 %1659
    %1661 = vrot.lane.b32.xlu0 %v1658, 96
    %v1662 = vpop.permute.xlu0 %1661
    %1663 = vrot.lane.b32.xlu0 %v1658, 32
    %v1664 = vpop.permute.xlu0 %1663
    %v1665 = vmul.f32 %v1660, %v1577
    %v1666 = vmul.f32 %v1662, %v1664
    %v1667 = vadd.f32 %v1665, %v1666
    %v1668 = vtanh.pop %v1667
    %v1669 = vmul.f32 %v1658, %v1668
    %1670 = vmatprep.subr.mxu0 0.0
    %1671 = vmatpush1.msra.mxu0 %v914
    %1672 = vmatprep.subr.mxu0 0.0
    %1673 = vmatpush1.msra.mxu0 %v915
    %1674 = vmatprep.subr.mxu0 0.0
    %1675 = vmatpush1.msra.mxu0 %v916
    %1676 = vmatprep.subr.mxu0 0.0
    %1677 = vmatpush1.msra.mxu0 %v917
    %1678 = vmatprep.subr.mxu0 0.0
    %1679 = vmatpush1.msra.mxu0 %v918
    %1680 = vmatprep.subr.mxu0 0.0
    %1681 = vmatpush1.msra.mxu0 %v919
    %1682 = vmatprep.subr.mxu0 0.0
    %1683 = vmatpush1.msra.mxu0 %v920
    %1684 = vmatprep.subr.mxu0 0.0
    %1685 = vmatpush1.msra.mxu0 %v921
    %1686 = vmatprep.subr.mxu0 0.0
    %1687 = vmatpush1.msra.mxu0 %v922
    %1688 = vmatprep.subr.mxu0 0.0
    %1689 = vmatpush1.msra.mxu0 %v923
    %1690 = vmatprep.subr.mxu0 0.0
    %1691 = vmatpush1.msra.mxu0 %v924
    %1692 = vmatprep.subr.mxu0 0.0
    %1693 = vmatpush1.msra.mxu0 %v925
    %1694 = vmatprep.subr.mxu0 0.0
    %1695 = vmatpush1.msra.mxu0 %v926
    %1696 = vmatprep.subr.mxu0 0.0
    %1697 = vmatpush1.msra.mxu0 %v927
    %1698 = vmatprep.subr.mxu0 0.0
    %1699 = vmatpush1.msra.mxu0 %v928
    %1700 = vmatprep.subr.mxu0 0.0
    %1701 = vmatpush1.msra.mxu0 %v929
    %1702 = vmatprep.subr.mxu0 0.0
    %1703 = vmatpush1.msra.mxu0 0.0
    %1704 = vmatprep.subr.mxu0 0.0
    %1705 = vmatpush1.msra.mxu0 0.0
    %1706 = vmatprep.subr.mxu0 0.0
    %1707 = vmatpush1.msra.mxu0 0.0
    %1708 = vmatprep.subr.mxu0 0.0
    %1709 = vmatpush1.msra.mxu0 0.0
    %1710 = vmatprep.subr.mxu0 0.0
    %1711 = vmatpush1.msra.mxu0 0.0
    %1712 = vmatprep.subr.mxu0 0.0
    %1713 = vmatpush1.msra.mxu0 0.0
    %1714 = vmatprep.subr.mxu0 0.0
    %1715 = vmatpush1.msra.mxu0 0.0
    %1716 = vmatprep.subr.mxu0 0.0
    %1717 = vmatpush1.msra.mxu0 0.0
    %1718 = vmatprep.subr.mxu0 0.0
    %1719 = vmatpush1.msra.mxu0 0.0
    %1720 = vmatprep.subr.mxu0 0.0
    %1721 = vmatpush1.msra.mxu0 0.0
    %1722 = vmatprep.subr.mxu0 0.0
    %1723 = vmatpush1.msra.mxu0 0.0
    %1724 = vmatprep.subr.mxu0 0.0
    %1725 = vmatpush1.msra.mxu0 0.0
    %1726 = vmatprep.subr.mxu0 0.0
    %1727 = vmatpush1.msra.mxu0 0.0
    %1728 = vmatprep.subr.mxu0 0.0
    %1729 = vmatpush1.msra.mxu0 0.0
    %1730 = vmatprep.subr.mxu0 0.0
    %1731 = vmatpush1.msra.mxu0 0.0
    %1732 = vmatprep.subr.mxu0 0.0
    %1733 = vmatpush1.msra.mxu0 0.0
    %1734 = vmatprep.mubr.f32.mxu0 0.0
    %1735 = vmatmul.mubr.f32.gmra.mrb[0].mxu0 %v1669
    %v1736 = vpop.f32.mrb[0].mxu0
    %v1737 = vadd.f32 0.0, %v1736
    %v1738 = vpop.f32.mrb[0].mxu0
    %1739 = vdwg.mxu0
    %v1740 = vadd.f32 %v1037, %v1737
    %v1741 = vtanh.pop %v1740
    %v1742 = vxor.u32 %v1740, 2147483648
    %v1743 = vmul.f32 %v1742, 1.442695
    %v1744 = vpow.pop %v1743
    %v1745 = vadd.f32 %v1744, 1.0
    %v1746 = vrcp.pop %v1745
    %v1747 = vmul.f32 1.0, %v1746
    %v1748 = vsel %vm27, %v1741, %v1747
    %1749 = vrot.lane.b32.xlu0 %v1748, 64
    %v1750 = vpop.permute.xlu0 %1749
    %1751 = vrot.lane.b32.xlu0 %v1748, 96
    %v1752 = vpop.permute.xlu0 %1751
    %1753 = vrot.lane.b32.xlu0 %v1748, 32
    %v1754 = vpop.permute.xlu0 %1753
    %v1755 = vmul.f32 %v1750, %v1667
    %v1756 = vmul.f32 %v1752, %v1754
    %v1757 = vadd.f32 %v1755, %v1756
    %v1758 = vtanh.pop %v1757
    %v1759 = vmul.f32 %v1748, %v1758
    %v1760 = vld [vmem:[#allocation2 + $0x210] sm:$0xff]
    %v1761 = vld [vmem:[#allocation2 + $0x218] sm:$0xff]
    %v1762 = vld [vmem:[#allocation2 + $0x220] sm:$0xff]
    %v1763 = vld [vmem:[#allocation2 + $0x228] sm:$0xff]
    %v1764 = vld [vmem:[#allocation2 + $0x230] sm:$0xff]
    %v1765 = vld [vmem:[#allocation2 + $0x238] sm:$0xff]
    %v1766 = vld [vmem:[#allocation2 + $0x240] sm:$0xff]
    %v1767 = vld [vmem:[#allocation2 + $0x248] sm:$0xff]
    %v1768 = vld [vmem:[#allocation2 + $0x250] sm:$0xff]
    %v1769 = vld [vmem:[#allocation2 + $0x258] sm:$0xff]
    %v1770 = vld [vmem:[#allocation2 + $0x260] sm:$0xff]
    %v1771 = vld [vmem:[#allocation2 + $0x268] sm:$0xff]
    %v1772 = vld [vmem:[#allocation2 + $0x270] sm:$0xff]
    %v1773 = vld [vmem:[#allocation2 + $0x278] sm:$0xff]
    %v1774 = vld [vmem:[#allocation2 + $0x280] sm:$0xff]
    %v1775 = vld [vmem:[#allocation2 + $0x288] sm:$0xff]
    %v1776 = vld [vmem:[#allocation2 + $0x290] sm:$0x1]
    %v1777 = vlaneseq
    %v1778 = vshrl.u32 %v1777, 7
    %v1779 = vsub.s32 0, %v1778
    %v1780 = vrot.slane %v1776, %v1779
    %1781 = vmatprep.subr.mxu0 0.0
    %1782 = vmatpush1.msra.mxu0 %v1760
    %1783 = vmatprep.subr.mxu0 0.0
    %1784 = vmatpush1.msra.mxu0 %v1761
    %1785 = vmatprep.subr.mxu0 0.0
    %1786 = vmatpush1.msra.mxu0 %v1762
    %1787 = vmatprep.subr.mxu0 0.0
    %1788 = vmatpush1.msra.mxu0 %v1763
    %1789 = vmatprep.subr.mxu0 0.0
    %1790 = vmatpush1.msra.mxu0 %v1764
    %1791 = vmatprep.subr.mxu0 0.0
    %1792 = vmatpush1.msra.mxu0 %v1765
    %1793 = vmatprep.subr.mxu0 0.0
    %1794 = vmatpush1.msra.mxu0 %v1766
    %1795 = vmatprep.subr.mxu0 0.0
    %1796 = vmatpush1.msra.mxu0 %v1767
    %1797 = vmatprep.subr.mxu0 0.0
    %1798 = vmatpush1.msra.mxu0 %v1768
    %1799 = vmatprep.subr.mxu0 0.0
    %1800 = vmatpush1.msra.mxu0 %v1769
    %1801 = vmatprep.subr.mxu0 0.0
    %1802 = vmatpush1.msra.mxu0 %v1770
    %1803 = vmatprep.subr.mxu0 0.0
    %1804 = vmatpush1.msra.mxu0 %v1771
    %1805 = vmatprep.subr.mxu0 0.0
    %1806 = vmatpush1.msra.mxu0 %v1772
    %1807 = vmatprep.subr.mxu0 0.0
    %1808 = vmatpush1.msra.mxu0 %v1773
    %1809 = vmatprep.subr.mxu0 0.0
    %1810 = vmatpush1.msra.mxu0 %v1774
    %1811 = vmatprep.subr.mxu0 0.0
    %1812 = vmatpush1.msra.mxu0 %v1775
    %1813 = vmatprep.subr.mxu0 0.0
    %1814 = vmatpush1.msra.mxu0 0.0
    %1815 = vmatprep.subr.mxu0 0.0
    %1816 = vmatpush1.msra.mxu0 0.0
    %1817 = vmatprep.subr.mxu0 0.0
    %1818 = vmatpush1.msra.mxu0 0.0
    %1819 = vmatprep.subr.mxu0 0.0
    %1820 = vmatpush1.msra.mxu0 0.0
    %1821 = vmatprep.subr.mxu0 0.0
    %1822 = vmatpush1.msra.mxu0 0.0
    %1823 = vmatprep.subr.mxu0 0.0
    %1824 = vmatpush1.msra.mxu0 0.0
    %1825 = vmatprep.subr.mxu0 0.0
    %1826 = vmatpush1.msra.mxu0 0.0
    %1827 = vmatprep.subr.mxu0 0.0
    %1828 = vmatpush1.msra.mxu0 0.0
    %1829 = vmatprep.subr.mxu0 0.0
    %1830 = vmatpush1.msra.mxu0 0.0
    %1831 = vmatprep.subr.mxu0 0.0
    %1832 = vmatpush1.msra.mxu0 0.0
    %1833 = vmatprep.subr.mxu0 0.0
    %1834 = vmatpush1.msra.mxu0 0.0
    %1835 = vmatprep.subr.mxu0 0.0
    %1836 = vmatpush1.msra.mxu0 0.0
    %1837 = vmatprep.subr.mxu0 0.0
    %1838 = vmatpush1.msra.mxu0 0.0
    %1839 = vmatprep.subr.mxu0 0.0
    %1840 = vmatpush1.msra.mxu0 0.0
    %1841 = vmatprep.subr.mxu0 0.0
    %1842 = vmatpush1.msra.mxu0 0.0
    %1843 = vmatprep.subr.mxu0 0.0
    %1844 = vmatpush1.msra.mxu0 0.0
    %1845 = vmatprep.mubr.f32.mxu0 0.0
    %1846 = vmatmul.mubr.f32.gmra.mrb[0].mxu0 %v1759
    %v1847 = vpop.f32.mrb[0].mxu0
    %v1848 = vadd.f32 %v1780, %v1847
    %v1849 = vpop.f32.mrb[0].mxu0
    %1850 = vdwg.mxu0
    %1851 = vst [vmem:[%s2] sm:$0xff] %v1848
    // Predicated region
    $region14: #{forward.1} parent=1 // pred_check
      _
    $region15: #{forward.1} parent=1 // pred_check_branch
      %1853 = sbr.rel (0) target = $region17
    $region16: #{forward.1} parent=1 // pred_region
      _
    $region17: #{forward.1} parent=1 // pred_fallthru
      _
    // Predicated region
    $region18: #{forward.1} parent=1 // pred_check
      _
    $region19: #{forward.1} parent=1 // pred_check_branch
      %1855 = sbr.rel (0) target = $region21
    $region20: #{forward.1} parent=1 // pred_region
      _
    $region21: #{forward.1} parent=1 // pred_fallthru
      _
    %1856 = vsyncpa [#allocation3], 1

</llo_original>
